<compile_context>
chip_gen: v5e
topology: v5e:2x2
jax: 0.10.0
libtpu: 0.0.40
codegen_flags: <defaults>
</compile_context>

<pallas_src>
import jax
import jax.numpy as jnp
from jax import lax
from jax.experimental import pallas as pl
from jax.experimental.pallas import tpu as pltpu


# ----------------------------------------------------------------------------
# Kernel 1: video encoder (3x3 conv + bias + ReLU + global avg pool) + MAE mapper.
# Grid: one program per TILE_BT frames.  im2col patches are prepared in the wrapper.
# ----------------------------------------------------------------------------
def video_encoder_kernel(patch_ref, wconv_ref, bconv_ref, pool_ref, wmap_ref,
                         bmap_ref, out_ref):
    # patch_ref : (9C, TILE_BT*H*W)  bf16   (im2col, frame-major / pixel-minor columns)
    # wconv_ref : (C_out, 9C)        bf16
    # bconv_ref : (C_out, 1)         f32
    # pool_ref  : (TILE_BT*H*W, TILE_BT) f32  block-diagonal 1/(H*W) average-pool matrix
    # wmap_ref  : (C_out, D)         f32
    # bmap_ref  : (1, D)             f32
    # out_ref   : (TILE_BT, D)       f32
    conv = jnp.dot(wconv_ref[...], patch_ref[...],
                   preferred_element_type=jnp.float32)        # (C_out, TILE_BT*H*W)
    conv = jnp.maximum(conv + bconv_ref[...], 0.0)            # bias + ReLU
    pooled = jnp.dot(conv, pool_ref[...],
                     preferred_element_type=jnp.float32)      # (C_out, TILE_BT) avg pool
    mapped = jnp.dot(pooled.T, wmap_ref[...],
                     preferred_element_type=jnp.float32)      # (TILE_BT, D) MAE mapper
    out_ref[...] = mapped + bmap_ref[...]


def video_encode(x, params, tile_bt=8):
    """x: (B, T, C, H, W) -> visual features (B, T, D)."""
    B, T, C, H, W = x.shape
    C_out = params["w_conv"].shape[0]
    D = params["w_map"].shape[1]
    BT, HW = B * T, H * W
    if BT % tile_bt != 0:
        tile_bt = BT
    n_blocks = BT // tile_bt

    # im2col in the wrapper: (9*C, B*T*H*W), offset-major / channel-minor rows,
    # frame-major / pixel-minor columns.
    x_pad = jnp.pad(x, ((0, 0), (0, 0), (0, 0), (1, 1), (1, 1)))
    cols = [x_pad[:, :, :, kh:kh + H, kw:kw + W]
            for kh in range(3) for kw in range(3)]             # 9 x (B, T, C, H, W)
    patches = jnp.stack(cols, axis=0)                          # (9, B, T, C, H, W)
    patches = patches.transpose(0, 3, 1, 2, 4, 5)              # (9, C, B, T, H, W)
    patches = patches.reshape(9 * C, BT * HW).astype(jnp.bfloat16)

    # conv weight as (C_out, 9*C), offset-major / channel-minor (matches patch rows).
    w_conv = jnp.transpose(params["w_conv"], (0, 2, 3, 1)).reshape(C_out, 9 * C)
    w_conv = w_conv.astype(jnp.bfloat16)
    b_conv = params["b_conv"].reshape(C_out, 1).astype(jnp.float32)
    # block-diagonal average-pool matrix: column t averages pixels of local frame t.
    pool = jnp.repeat(jnp.eye(tile_bt, dtype=jnp.float32), HW, axis=0) / float(HW)
    w_map = params["w_map"].astype(jnp.float32)                # (C_out, D)
    b_map = params["b_map"].reshape(1, D).astype(jnp.float32)

    feats = pl.pallas_call(
        video_encoder_kernel,
        out_shape=jax.ShapeDtypeStruct((BT, D), jnp.float32),
        grid=(n_blocks,),
        in_specs=[
            pl.BlockSpec((9 * C, tile_bt * HW), lambda i: (0, i)),
            pl.BlockSpec((C_out, 9 * C), lambda i: (0, 0)),
            pl.BlockSpec((C_out, 1), lambda i: (0, 0)),
            pl.BlockSpec((tile_bt * HW, tile_bt), lambda i: (0, 0)),
            pl.BlockSpec((C_out, D), lambda i: (0, 0)),
            pl.BlockSpec((1, D), lambda i: (0, 0)),
        ],
        out_specs=pl.BlockSpec((tile_bt, D), lambda i: (i, 0)),
        compiler_params=pltpu.CompilerParams(dimension_semantics=("parallel",)),
    )(patches, w_conv, b_conv, pool, w_map, b_map)

    return feats.reshape(B, T, D)


# ----------------------------------------------------------------------------
# Kernel 2: translation model.  Whole batch in a single grid step.
# Cross-attention of target embeddings over visual features (frames masked by
# ipt_len), vocab projection (vocab padded to a multiple of 128 lanes), and
# cross-entropy loss computed with an iota==trg pick (no materialized one-hot).
# ----------------------------------------------------------------------------
def translation_kernel(vis_ref, emb_ref, trg_ref, len_ref, wout_ref, bout_ref,
                       logits_ref, loss_ref):
    v = vis_ref[...]                                   # (B, T, D) bf16
    e = emb_ref[...]                                   # (B, L, D) bf16
    B, T, D = v.shape
    L = e.shape[1]
    Vp = wout_ref.shape[1]

    # cross attention of target embeddings over visual features
    scale = 1.0 / (D ** 0.5)
    scores = jnp.einsum('bld,btd->blt', e, v,
                        preferred_element_type=jnp.float32) * scale      # (B, L, T)

    # mask frames beyond the true video length
    t_idx = lax.broadcasted_iota(jnp.int32, (B, L, T), 2)
    lengths = len_ref[...].reshape(B, 1, 1)                              # (B, 1, 1)
    scores = jnp.where(t_idx < lengths, scores, -1e30)

    m = jnp.max(scores, axis=-1, keepdims=True)
    p = jnp.exp(scores - m)
    attn = p / jnp.sum(p, axis=-1, keepdims=True)
    ctx = jnp.einsum('blt,btd->bld', attn.astype(v.dtype), v,
                     preferred_element_type=jnp.float32)                 # (B, L, D)

    h = e.astype(jnp.float32) + ctx                                      # (B, L, D)
    h2 = h.reshape(B * L, D).astype(wout_ref.dtype)                      # (B*L, D)
    logits = jnp.dot(h2, wout_ref[...],
                     preferred_element_type=jnp.float32) + bout_ref[...]  # (B*L, Vp)
    logits_ref[...] = logits

    # cross-entropy loss vs. target tokens (padded vocab columns carry bias -1e30,
    # so they contribute nothing to the log-sum-exp).
    lm = jnp.max(logits, axis=-1, keepdims=True)
    lse = jnp.log(jnp.sum(jnp.exp(logits - lm), axis=-1, keepdims=True)) + lm  # (B*L, 1)
    v_idx = lax.broadcasted_iota(jnp.int32, (B * L, Vp), 1)
    picked = jnp.sum(jnp.where(v_idx == trg_ref[...], logits, 0.0),
                     axis=-1, keepdims=True)                             # (B*L, 1)
    # TODO(synk): real mBART loss ignores pad tokens; no target-padding mask here.
    loss_ref[...] = jnp.sum(lse - picked, axis=(0, 1), keepdims=True)    # (1, 1)


def translate(vis, trg, ipt_len, params):
    B, T, D = vis.shape
    L = trg.shape[1]
    V = params["w_out"].shape[1]
    Vp = ((V + 127) // 128) * 128

    # embedding lookup (gather) kept in XLA glue
    emb = jnp.take(params["emb"], trg, axis=0).astype(jnp.bfloat16)      # (B, L, D)
    vis_bf = vis.astype(jnp.bfloat16)
    w_out = jnp.zeros((D, Vp), jnp.bfloat16).at[:, :V].set(
        params["w_out"].astype(jnp.bfloat16))
    b_out = jnp.full((1, Vp), -1e30, jnp.float32).at[0, :V].set(
        params["b_out"].astype(jnp.float32))
    trg_col = trg.reshape(B * L, 1).astype(jnp.int32)
    len_col = ipt_len.reshape(B, 1).astype(jnp.int32)

    logits_p, loss_sum = pl.pallas_call(
        translation_kernel,
        out_shape=(
            jax.ShapeDtypeStruct((B * L, Vp), jnp.float32),
            jax.ShapeDtypeStruct((1, 1), jnp.float32),
        ),
        grid=(1,),
        in_specs=[
            pl.BlockSpec((B, T, D), lambda i: (0, 0, 0)),
            pl.BlockSpec((B, L, D), lambda i: (0, 0, 0)),
            pl.BlockSpec((B * L, 1), lambda i: (0, 0)),
            pl.BlockSpec((B, 1), lambda i: (0, 0)),
            pl.BlockSpec((D, Vp), lambda i: (0, 0)),
            pl.BlockSpec((1, Vp), lambda i: (0, 0)),
        ],
        out_specs=(
            pl.BlockSpec((B * L, Vp), lambda i: (0, 0)),
            pl.BlockSpec((1, 1), lambda i: (0, 0)),
        ),
        compiler_params=pltpu.CompilerParams(dimension_semantics=("arbitrary",)),
    )(vis_bf, emb, trg_col, len_col, w_out, b_out)

    logits = logits_p.reshape(B, L, Vp)[:, :, :V]
    loss = loss_sum[0, 0] / (B * L)
    return logits, loss


# ----------------------------------------------------------------------------
# Sign2Text.forward(x, trg, ipt_len) -> (out, loss)
# ----------------------------------------------------------------------------
def sign2text_forward(x, trg, ipt_len, params):
    feats = video_encode(x, params)                       # video_encoder + MAE_mapper
    out, loss = translate(feats, trg, ipt_len, params)    # language_model
    return out, loss


if __name__ == "__main__":
    B, T, C, H, W = 2, 8, 4, 16, 16
    C_OUT, D, L, V = 32, 32, 8, 64

    key = jax.random.PRNGKey(0)
    keys = jax.random.split(key, 8)
    params = {
        "w_conv": jax.random.normal(keys[0], (C_OUT, C, 3, 3), jnp.float32) * 0.1,
        "b_conv": jax.random.normal(keys[1], (C_OUT,), jnp.float32) * 0.01,
        "w_map":  jax.random.normal(keys[2], (C_OUT, D), jnp.float32) * 0.1,
        "b_map":  jax.random.normal(keys[3], (D,), jnp.float32) * 0.01,
        "emb":    jax.random.normal(keys[4], (V, D), jnp.float32) * 0.1,
        "w_out":  jax.random.normal(keys[5], (D, V), jnp.float32) * 0.1,
        "b_out":  jnp.zeros((V,), jnp.float32),
    }

    x = jax.random.normal(keys[6], (B, T, C, H, W), jnp.float32)
    trg = jax.random.randint(keys[7], (B, L), 0, V, dtype=jnp.int32)
    ipt_len = jnp.array([T, T - 3], dtype=jnp.int32)

    out, loss = sign2text_forward(x, trg, ipt_len, params)
    jax.block_until_ready((out, loss))

    assert out.shape == (B, L, V)
    assert loss.shape == ()
    assert bool(jnp.isfinite(loss))
    assert bool(jnp.all(jnp.isfinite(out)))
    print("KERNEL_OK")
</pallas_src>

<mosaic_0001>
module attributes {stable_mosaic.version = 11 : i64} {
  func.func @video_encoder_kernel(%arg0: i32, %arg1: memref<36x2048xbf16, #tpu.memory_space<vmem>>, %arg2: memref<32x36xbf16, #tpu.memory_space<vmem>>, %arg3: memref<32x1xf32, #tpu.memory_space<vmem>>, %arg4: memref<2048x8xf32, #tpu.memory_space<vmem>>, %arg5: memref<32x32xf32, #tpu.memory_space<vmem>>, %arg6: memref<1x32xf32, #tpu.memory_space<vmem>>, %arg7: memref<8x32xf32, #tpu.memory_space<vmem>>) attributes {dimension_semantics = [#tpu.dimension_semantics<parallel>], iteration_bounds = array<i64: 2>, scalar_prefetch = 0 : i64, scratch_operands = 0 : i64, tpu.core_type = #tpu.core_type<tc>, window_params = [{transform_indices = @transform_0, window_bounds = array<i64: 36, 2048>}, {pipeline_mode = #tpu.pipeline_mode<synchronous>, transform_indices = @transform_1, window_bounds = array<i64: 32, 36>}, {pipeline_mode = #tpu.pipeline_mode<synchronous>, transform_indices = @transform_2, window_bounds = array<i64: 32, 1>}, {pipeline_mode = #tpu.pipeline_mode<synchronous>, transform_indices = @transform_3, window_bounds = array<i64: 2048, 8>}, {pipeline_mode = #tpu.pipeline_mode<synchronous>, transform_indices = @transform_4, window_bounds = array<i64: 32, 32>}, {pipeline_mode = #tpu.pipeline_mode<synchronous>, transform_indices = @transform_5, window_bounds = array<i64: 1, 32>}, {transform_indices = @transform_6, window_bounds = array<i64: 8, 32>}]} {
    %c0 = arith.constant 0 : index
    %c0_0 = arith.constant 0 : index
    %0 = vector.load %arg2[%c0, %c0_0] : memref<32x36xbf16, #tpu.memory_space<vmem>>, vector<32x36xbf16>
    %c0_1 = arith.constant 0 : index
    %c0_2 = arith.constant 0 : index
    %1 = vector.load %arg1[%c0_1, %c0_2] : memref<36x2048xbf16, #tpu.memory_space<vmem>>, vector<36x2048xbf16>
    %cst = arith.constant dense<0.000000e+00> : vector<32x2048xf32>
    %2 = tpu.matmul %0, %1, %cst {dimension_numbers = #tpu.dot_dimension_numbers<[1], [0], [0], [1], [0, 0, 1, 1], [], []>} : vector<32x36xbf16>, vector<36x2048xbf16>, vector<32x2048xf32> -> vector<32x2048xf32>
    %c0_3 = arith.constant 0 : index
    %c0_4 = arith.constant 0 : index
    %3 = vector.load %arg3[%c0_3, %c0_4] : memref<32x1xf32, #tpu.memory_space<vmem>>, vector<32x1xf32>
    %4 = vector.broadcast %3 : vector<32x1xf32> to vector<32x2048xf32>
    %5 = arith.addf %2, %4 : vector<32x2048xf32>
    %cst_5 = arith.constant 0.000000e+00 : f32
    %6 = vector.broadcast %cst_5 : f32 to vector<32x2048xf32>
    %7 = arith.maximumf %5, %6 : vector<32x2048xf32>
    %c0_6 = arith.constant 0 : index
    %c0_7 = arith.constant 0 : index
    %8 = vector.load %arg4[%c0_6, %c0_7] : memref<2048x8xf32, #tpu.memory_space<vmem>>, vector<2048x8xf32>
    %cst_8 = arith.constant dense<0.000000e+00> : vector<32x8xf32>
    %9 = tpu.matmul %7, %8, %cst_8 {dimension_numbers = #tpu.dot_dimension_numbers<[1], [0], [0], [1], [0, 0, 1, 1], [], []>} : vector<32x2048xf32>, vector<2048x8xf32>, vector<32x8xf32> -> vector<32x8xf32>
    %10 = tpu.transpose %9, [1, 0] : vector<32x8xf32> -> vector<8x32xf32>
    %c0_9 = arith.constant 0 : index
    %c0_10 = arith.constant 0 : index
    %11 = vector.load %arg5[%c0_9, %c0_10] : memref<32x32xf32, #tpu.memory_space<vmem>>, vector<32x32xf32>
    %cst_11 = arith.constant dense<0.000000e+00> : vector<8x32xf32>
    %12 = tpu.matmul %10, %11, %cst_11 {dimension_numbers = #tpu.dot_dimension_numbers<[1], [0], [0], [1], [0, 0, 1, 1], [], []>} : vector<8x32xf32>, vector<32x32xf32>, vector<8x32xf32> -> vector<8x32xf32>
    %c0_12 = arith.constant 0 : index
    %c0_13 = arith.constant 0 : index
    %13 = vector.load %arg6[%c0_12, %c0_13] : memref<1x32xf32, #tpu.memory_space<vmem>>, vector<1x32xf32>
    %14 = vector.broadcast %13 : vector<1x32xf32> to vector<8x32xf32>
    %15 = arith.addf %12, %14 : vector<8x32xf32>
    %c0_14 = arith.constant 0 : index
    %c0_15 = arith.constant 0 : index
    %16 = vector.load %arg7[%c0_14, %c0_15] : memref<8x32xf32, #tpu.memory_space<vmem>>, vector<8x32xf32>
    tpu.vector_store %arg7[%c0_14, %c0_15], %15 {strides = array<i32>} : memref<8x32xf32, #tpu.memory_space<vmem>>, vector<8x32xf32>,
    return
  }
  func.func @transform_0(%arg0: i32) -> (i32, i32) {
    %c0_i32 = arith.constant 0 : i32
    %c0_i32_0 = arith.constant 0 : i32
    return %c0_i32, %arg0 : i32, i32
  }
  func.func @transform_1(%arg0: i32) -> (i32, i32) {
    %c0_i32 = arith.constant 0 : i32
    %c0_i32_0 = arith.constant 0 : i32
    %c0_i32_1 = arith.constant 0 : i32
    return %c0_i32, %c0_i32_0 : i32, i32
  }
  func.func @transform_2(%arg0: i32) -> (i32, i32) {
    %c0_i32 = arith.constant 0 : i32
    %c0_i32_0 = arith.constant 0 : i32
    %c0_i32_1 = arith.constant 0 : i32
    return %c0_i32, %c0_i32_0 : i32, i32
  }
  func.func @transform_3(%arg0: i32) -> (i32, i32) {
    %c0_i32 = arith.constant 0 : i32
    %c0_i32_0 = arith.constant 0 : i32
    %c0_i32_1 = arith.constant 0 : i32
    return %c0_i32, %c0_i32_0 : i32, i32
  }
  func.func @transform_4(%arg0: i32) -> (i32, i32) {
    %c0_i32 = arith.constant 0 : i32
    %c0_i32_0 = arith.constant 0 : i32
    %c0_i32_1 = arith.constant 0 : i32
    return %c0_i32, %c0_i32_0 : i32, i32
  }
  func.func @transform_5(%arg0: i32) -> (i32, i32) {
    %c0_i32 = arith.constant 0 : i32
    %c0_i32_0 = arith.constant 0 : i32
    %c0_i32_1 = arith.constant 0 : i32
    return %c0_i32, %c0_i32_0 : i32, i32
  }
  func.func @transform_6(%arg0: i32) -> (i32, i32) {
    %c0_i32 = arith.constant 0 : i32
    %c0_i32_0 = arith.constant 0 : i32
    return %arg0, %c0_i32 : i32, i32
  }
}

</mosaic_0001>

<llo_original>
// kernel: tpu_custom_call.1
$region0: #{tpu_custom_call.1}
  #allocation0 [shape = 'u32[]', space=smem, size = 0x4, offset = 0x4, fixed_abs, tag = 'smem constant byte address 0x4 - core index']
  #allocation1 [shape = 'u32[72,128]{1,0:T(1,128)}', space=vmem, size = 0x9000, scoped, tag = 'internal scratch']
  %s0 = inlined_call_operand.vmem [shape: bf16[36,4096], index: 0, kind: input, shape index: {}]
  %s1 = inlined_call_operand.vmem [shape: bf16[32,36], index: 1, kind: input, shape index: {}]
  %s2 = inlined_call_operand.vmem [shape: f32[32,1], index: 2, kind: input, shape index: {}]
  %s3 = inlined_call_operand.vmem [shape: f32[2048,8], index: 3, kind: input, shape index: {}]
  %s4 = inlined_call_operand.vmem [shape: f32[32,32], index: 4, kind: input, shape index: {}]
  %s5 = inlined_call_operand.vmem [shape: f32[1,32], index: 5, kind: input, shape index: {}]
  %s6 = inlined_call_operand.hbm [shape: f32[16,32], index: 6, kind: output, shape index: {}]
  %s7 = sld [smem:[#allocation0]]
  $region80: #{tpu_custom_call.1} parent=0
    _
  %s9 = ssub.s32 1, %s7
  %s10 = scalar_select 0, %s9, %s7
  $region1: #{tpu_custom_call.1} parent=0
    #allocation2 [shape = 'u8[327680]{0}', space=vmem, size = 0x50000, scoped, tag = 'input window, operand 0']
    #allocation3 [shape = 'u8[8192]{0}', space=vmem, size = 0x2000, scoped, tag = 'output window, operand 0']
    #allocation4 [shape = 's32[2]{0}', space=sflag, size = 0x8, scoped, tag = 'scoped memory for tpu_custom_call.1']
    %11 = vsyncpa [#allocation4], 0
    %s12 = scalar_lea.sflag [#allocation4], 1
    %13 = vsyncpa %s12, 0
    loop: start=0, step=1, limit=4
    $region2: #{tpu_custom_call.1} parent=1 // loop_pre_header
      _
    $region3: #{tpu_custom_call.1} parent=1 // loop_header
      %s15 = sphi 0, %s19
      %p16 = scmp.ge.s32.totalorder %s15, 4
      %s25 = sphi 0, %s27
      %s28 = sphi 0, %s25
      %s29 = sphi 0, %s28
      %s45 = sphi 0, %s29
      %s49 = sphi 0, %s49
      %s51 = sphi 0, %s49
      %s52 = sphi 0, %s51
      %s66 = sphi 0, %s52
      %s70 = sphi 0, %s70
      %s72 = sphi 0, %s70
      %s73 = sphi 0, %s72
      %s87 = sphi 0, %s73
      %s91 = sphi 0, %s91
      %s93 = sphi 0, %s91
      %s94 = sphi 0, %s93
      %s108 = sphi 0, %s94
      %s112 = sphi 0, %s112
      %s114 = sphi 0, %s112
      %s115 = sphi 0, %s114
      %s129 = sphi 0, %s115
      %s133 = sphi 0, %s133
      %s135 = sphi 0, %s133
      %s136 = sphi 0, %s135
      %s150 = sphi 0, %s136
      %s156 = sphi 0, %s158
      %s159 = sphi 0, %s156
      %s160 = sphi 0, %s159
      %s176 = sphi 0, %s160
    $region4: #{tpu_custom_call.1} parent=1 // loop_header_branch
      %18 = sbr.rel (%p16) target = $region8
    $region5: #{tpu_custom_call.1} parent=1 // loop_body
      %s20 = ssub.s32 %s15, 1
      %s21 = ssub.s32 %s15, 2
      %s22 = sadd.s32 %s15, 1
      %s23 = ssub.s32 %s15, %s22
      %p24 = scmp.eq.s32.totalorder %s23, 0
      %s26 = sadd.s32 %s25, 1
      %s27 = scalar_select %p24, %s25, %s26
      %p30 = pneg %p24
      %p31 = scmp.eq.s32.totalorder %s15, 1
      %p32 = por %p30, %p31
      %p33 = scmp.ne.s32.totalorder %s25, %s28
      %p34 = scmp.eq.s32.totalorder %s15, 0
      %p35 = por %p33, %p34
      %p36 = scmp.ne.s32.totalorder %s25, %s28
      %p37 = scmp.eq.s32.totalorder %s20, 1
      %p38 = por %p36, %p37
      %p39 = scmp.ne.s32.totalorder %s28, %s29
      %p40 = scmp.eq.s32.totalorder %s20, 0
      %p41 = por %p39, %p40
      %p42 = scmp.ne.s32.totalorder %s28, %s29
      %p43 = scmp.eq.s32.totalorder %s21, 1
      %p44 = por %p42, %p43
      %p46 = scmp.ne.s32.totalorder %s29, %s45
      %p47 = scmp.eq.s32.totalorder %s21, 0
      %p48 = por %p46, %p47
      %s50 = sadd.s32 %s49, 1
      %p53 = scmp.eq.s32.totalorder %s15, 1
      %p54 = scmp.ne.s32.totalorder %s49, %s51
      %p55 = scmp.eq.s32.totalorder %s15, 0
      %p56 = por %p54, %p55
      %p57 = scmp.ne.s32.totalorder %s49, %s51
      %p58 = scmp.eq.s32.totalorder %s20, 1
      %p59 = por %p57, %p58
      %p60 = scmp.ne.s32.totalorder %s51, %s52
      %p61 = scmp.eq.s32.totalorder %s20, 0
      %p62 = por %p60, %p61
      %p63 = scmp.ne.s32.totalorder %s51, %s52
      %p64 = scmp.eq.s32.totalorder %s21, 1
      %p65 = por %p63, %p64
      %p67 = scmp.ne.s32.totalorder %s52, %s66
      %p68 = scmp.eq.s32.totalorder %s21, 0
      %p69 = por %p67, %p68
      %s71 = sadd.s32 %s70, 1
      %p74 = scmp.eq.s32.totalorder %s15, 1
      %p75 = scmp.ne.s32.totalorder %s70, %s72
      %p76 = scmp.eq.s32.totalorder %s15, 0
      %p77 = por %p75, %p76
      %p78 = scmp.ne.s32.totalorder %s70, %s72
      %p79 = scmp.eq.s32.totalorder %s20, 1
      %p80 = por %p78, %p79
      %p81 = scmp.ne.s32.totalorder %s72, %s73
      %p82 = scmp.eq.s32.totalorder %s20, 0
      %p83 = por %p81, %p82
      %p84 = scmp.ne.s32.totalorder %s72, %s73
      %p85 = scmp.eq.s32.totalorder %s21, 1
      %p86 = por %p84, %p85
      %p88 = scmp.ne.s32.totalorder %s73, %s87
      %p89 = scmp.eq.s32.totalorder %s21, 0
      %p90 = por %p88, %p89
      %s92 = sadd.s32 %s91, 1
      %p95 = scmp.eq.s32.totalorder %s15, 1
      %p96 = scmp.ne.s32.totalorder %s91, %s93
      %p97 = scmp.eq.s32.totalorder %s15, 0
      %p98 = por %p96, %p97
      %p99 = scmp.ne.s32.totalorder %s91, %s93
      %p100 = scmp.eq.s32.totalorder %s20, 1
      %p101 = por %p99, %p100
      %p102 = scmp.ne.s32.totalorder %s93, %s94
      %p103 = scmp.eq.s32.totalorder %s20, 0
      %p104 = por %p102, %p103
      %p105 = scmp.ne.s32.totalorder %s93, %s94
      %p106 = scmp.eq.s32.totalorder %s21, 1
      %p107 = por %p105, %p106
      %p109 = scmp.ne.s32.totalorder %s94, %s108
      %p110 = scmp.eq.s32.totalorder %s21, 0
      %p111 = por %p109, %p110
      %s113 = sadd.s32 %s112, 1
      %p116 = scmp.eq.s32.totalorder %s15, 1
      %p117 = scmp.ne.s32.totalorder %s112, %s114
      %p118 = scmp.eq.s32.totalorder %s15, 0
      %p119 = por %p117, %p118
      %p120 = scmp.ne.s32.totalorder %s112, %s114
      %p121 = scmp.eq.s32.totalorder %s20, 1
      %p122 = por %p120, %p121
      %p123 = scmp.ne.s32.totalorder %s114, %s115
      %p124 = scmp.eq.s32.totalorder %s20, 0
      %p125 = por %p123, %p124
      %p126 = scmp.ne.s32.totalorder %s114, %s115
      %p127 = scmp.eq.s32.totalorder %s21, 1
      %p128 = por %p126, %p127
      %p130 = scmp.ne.s32.totalorder %s115, %s129
      %p131 = scmp.eq.s32.totalorder %s21, 0
      %p132 = por %p130, %p131
      %s134 = sadd.s32 %s133, 1
      %p137 = scmp.eq.s32.totalorder %s15, 1
      %p138 = scmp.ne.s32.totalorder %s133, %s135
      %p139 = scmp.eq.s32.totalorder %s15, 0
      %p140 = por %p138, %p139
      %p141 = scmp.ne.s32.totalorder %s133, %s135
      %p142 = scmp.eq.s32.totalorder %s20, 1
      %p143 = por %p141, %p142
      %p144 = scmp.ne.s32.totalorder %s135, %s136
      %p145 = scmp.eq.s32.totalorder %s20, 0
      %p146 = por %p144, %p145
      %p147 = scmp.ne.s32.totalorder %s135, %s136
      %p148 = scmp.eq.s32.totalorder %s21, 1
      %p149 = por %p147, %p148
      %p151 = scmp.ne.s32.totalorder %s136, %s150
      %p152 = scmp.eq.s32.totalorder %s21, 0
      %p153 = por %p151, %p152
      %s154 = ssub.s32 %s15, %s22
      %p155 = scmp.eq.s32.totalorder %s154, 0
      %s157 = sadd.s32 %s156, 1
      %s158 = scalar_select %p155, %s156, %s157
      %p161 = pneg %p155
      %p162 = scmp.eq.s32.totalorder %s15, 1
      %p163 = por %p161, %p162
      %p164 = scmp.ne.s32.totalorder %s156, %s159
      %p165 = scmp.eq.s32.totalorder %s15, 0
      %p166 = por %p164, %p165
      %p167 = scmp.ne.s32.totalorder %s156, %s159
      %p168 = scmp.eq.s32.totalorder %s20, 1
      %p169 = por %p167, %p168
      %p170 = scmp.ne.s32.totalorder %s159, %s160
      %p171 = scmp.eq.s32.totalorder %s20, 0
      %p172 = por %p170, %p171
      %p173 = scmp.ne.s32.totalorder %s159, %s160
      %p174 = scmp.eq.s32.totalorder %s21, 1
      %p175 = por %p173, %p174
      %p177 = scmp.ne.s32.totalorder %s160, %s176
      %p178 = scmp.eq.s32.totalorder %s21, 0
      %p179 = por %p177, %p178
      %p180 = scmp.le.s32.totalorder 1, %s15
      %p181 = scmp.lt.s32.totalorder %s15, 3
      %p182 = pnand %p180, %p181
      %p183 = pneg %p182
      // Predicated region
      $region9: #{tpu_custom_call.1} parent=5 // pred_check
        _
      $region10: #{tpu_custom_call.1} parent=5 // pred_check_branch
        %185 = sbr.rel (%p182) target = $region12
      $region11: #{tpu_custom_call.1} parent=5 // pred_region
        %s186 = ssub.s32 %s15, 1
        // Predicated region
        $region13: #{tpu_custom_call.1} parent=11 // pred_check
          %p187 = pneg %p62
        $region14: #{tpu_custom_call.1} parent=11 // pred_check_branch
          %189 = sbr.rel (%p187) target = $region16
        $region15: #{tpu_custom_call.1} parent=11 // pred_region
          _
        $region16: #{tpu_custom_call.1} parent=11 // pred_fallthru
          _
        // Predicated region
        $region17: #{tpu_custom_call.1} parent=11 // pred_check
          %p190 = pneg %p83
        $region18: #{tpu_custom_call.1} parent=11 // pred_check_branch
          %192 = sbr.rel (%p190) target = $region20
        $region19: #{tpu_custom_call.1} parent=11 // pred_region
          _
        $region20: #{tpu_custom_call.1} parent=11 // pred_fallthru
          _
        // Predicated region
        $region21: #{tpu_custom_call.1} parent=11 // pred_check
          %p193 = pneg %p104
        $region22: #{tpu_custom_call.1} parent=11 // pred_check_branch
          %195 = sbr.rel (%p193) target = $region24
        $region23: #{tpu_custom_call.1} parent=11 // pred_region
          _
        $region24: #{tpu_custom_call.1} parent=11 // pred_fallthru
          _
        // Predicated region
        $region25: #{tpu_custom_call.1} parent=11 // pred_check
          %p196 = pneg %p125
        $region26: #{tpu_custom_call.1} parent=11 // pred_check_branch
          %198 = sbr.rel (%p196) target = $region28
        $region27: #{tpu_custom_call.1} parent=11 // pred_region
          _
        $region28: #{tpu_custom_call.1} parent=11 // pred_fallthru
          _
        // Predicated region
        $region29: #{tpu_custom_call.1} parent=11 // pred_check
          %p199 = pneg %p146
        $region30: #{tpu_custom_call.1} parent=11 // pred_check_branch
          %201 = sbr.rel (%p199) target = $region32
        $region31: #{tpu_custom_call.1} parent=11 // pred_region
          _
        $region32: #{tpu_custom_call.1} parent=11 // pred_fallthru
          _
      $region12: #{tpu_custom_call.1} parent=5 // pred_fallthru
        _
      %p202 = scmp.lt.s32.totalorder %s15, 2
      // Predicated region
      $region33: #{tpu_custom_call.1} parent=5 // pred_check
        %p203 = pneg %p202
      $region34: #{tpu_custom_call.1} parent=5 // pred_check_branch
        %205 = sbr.rel (%p203) target = $region36
      $region35: #{tpu_custom_call.1} parent=5 // pred_region
        // Predicated region
        $region37: #{tpu_custom_call.1} parent=35 // pred_check
          %p206 = pneg %p35
        $region38: #{tpu_custom_call.1} parent=35 // pred_check_branch
          %208 = sbr.rel (%p206) target = $region40
        $region39: #{tpu_custom_call.1} parent=35 // pred_region
          %s209 = sand.u32 %s25, 1
          %s210 = sand.u32 %s25, 1
          %s211 = smul.addr %s210, 320
          %s212 = scalar_lea.vmem [#allocation2], %s211
          %s213 = smul.u32 16, %s15
          %s214 = smul.addr %s213, 4
          %s215 = scalar_lea.vmem %s0, %s214
          // Predicated region
          $region41: #{tpu_custom_call.1} parent=39 // pred_check
            _
          $region42: #{tpu_custom_call.1} parent=39 // pred_check_branch
            %217 = sbr.rel (0) target = $region44
          $region43: #{tpu_custom_call.1} parent=39 // pred_region
            // Predicated region
            $region45: #{tpu_custom_call.1} parent=43 // pred_check
              _
            $region46: #{tpu_custom_call.1} parent=43 // pred_check_branch
              %219 = sbr.rel (0) target = $region48
            $region47: #{tpu_custom_call.1} parent=43 // pred_region
              loop: start=0, step=1, limit=1
              $region49: #{tpu_custom_call.1} parent=47 // loop_pre_header
                _
              $region50: #{tpu_custom_call.1} parent=47 // loop_header
                %s221 = sphi 0, %s225
                %p222 = scmp.ge.s32.totalorder %s221, 1
                %s226 = sphi %s215, %s215
                %s227 = sphi %s212, %s212
              $region51: #{tpu_custom_call.1} parent=47 // loop_header_branch
                %224 = sbr.rel (%p222) target = $region55
              $region52: #{tpu_custom_call.1} parent=47 // loop_body
                %v228 = vld [vmem:[%s226] sm:$0xff]
                %229 = vst [vmem:[%s227] sm:$0xff] %v228
                %v230 = vld [vmem:[%s226 + $0x8] sm:$0xff]
                %231 = vst [vmem:[%s227 + $0x8] sm:$0xff] %v230
                %v232 = vld [vmem:[%s226 + $0x10] sm:$0xff]
                %233 = vst [vmem:[%s227 + $0x10] sm:$0xff] %v232
                %v234 = vld [vmem:[%s226 + $0x18] sm:$0xff]
                %235 = vst [vmem:[%s227 + $0x18] sm:$0xff] %v234
                %v236 = vld [vmem:[%s226 + $0x20] sm:$0xff]
                %237 = vst [vmem:[%s227 + $0x20] sm:$0xff] %v236
                %v238 = vld [vmem:[%s226 + $0x28] sm:$0xff]
                %239 = vst [vmem:[%s227 + $0x28] sm:$0xff] %v238
                %v240 = vld [vmem:[%s226 + $0x30] sm:$0xff]
                %241 = vst [vmem:[%s227 + $0x30] sm:$0xff] %v240
                %v242 = vld [vmem:[%s226 + $0x38] sm:$0xff]
                %243 = vst [vmem:[%s227 + $0x38] sm:$0xff] %v242
                %v244 = vld [vmem:[%s226 + $0x80] sm:$0xff]
                %245 = vst [vmem:[%s227 + $0x40] sm:$0xff] %v244
                %v246 = vld [vmem:[%s226 + $0x88] sm:$0xff]
                %247 = vst [vmem:[%s227 + $0x48] sm:$0xff] %v246
                %v248 = vld [vmem:[%s226 + $0x90] sm:$0xff]
                %249 = vst [vmem:[%s227 + $0x50] sm:$0xff] %v248
                %v250 = vld [vmem:[%s226 + $0x98] sm:$0xff]
                %251 = vst [vmem:[%s227 + $0x58] sm:$0xff] %v250
                %v252 = vld [vmem:[%s226 + $0xa0] sm:$0xff]
                %253 = vst [vmem:[%s227 + $0x60] sm:$0xff] %v252
                %v254 = vld [vmem:[%s226 + $0xa8] sm:$0xff]
                %255 = vst [vmem:[%s227 + $0x68] sm:$0xff] %v254
                %v256 = vld [vmem:[%s226 + $0xb0] sm:$0xff]
                %257 = vst [vmem:[%s227 + $0x70] sm:$0xff] %v256
                %v258 = vld [vmem:[%s226 + $0xb8] sm:$0xff]
                %259 = vst [vmem:[%s227 + $0x78] sm:$0xff] %v258
                %v260 = vld [vmem:[%s226 + $0x100] sm:$0xff]
                %261 = vst [vmem:[%s227 + $0x80] sm:$0xff] %v260
                %v262 = vld [vmem:[%s226 + $0x108] sm:$0xff]
                %263 = vst [vmem:[%s227 + $0x88] sm:$0xff] %v262
                %v264 = vld [vmem:[%s226 + $0x110] sm:$0xff]
                %265 = vst [vmem:[%s227 + $0x90] sm:$0xff] %v264
                %v266 = vld [vmem:[%s226 + $0x118] sm:$0xff]
                %267 = vst [vmem:[%s227 + $0x98] sm:$0xff] %v266
                %v268 = vld [vmem:[%s226 + $0x120] sm:$0xff]
                %269 = vst [vmem:[%s227 + $0xa0] sm:$0xff] %v268
                %v270 = vld [vmem:[%s226 + $0x128] sm:$0xff]
                %271 = vst [vmem:[%s227 + $0xa8] sm:$0xff] %v270
                %v272 = vld [vmem:[%s226 + $0x130] sm:$0xff]
                %273 = vst [vmem:[%s227 + $0xb0] sm:$0xff] %v272
                %v274 = vld [vmem:[%s226 + $0x138] sm:$0xff]
                %275 = vst [vmem:[%s227 + $0xb8] sm:$0xff] %v274
                %v276 = vld [vmem:[%s226 + $0x180] sm:$0xff]
                %277 = vst [vmem:[%s227 + $0xc0] sm:$0xff] %v276
                %v278 = vld [vmem:[%s226 + $0x188] sm:$0xff]
                %279 = vst [vmem:[%s227 + $0xc8] sm:$0xff] %v278
                %v280 = vld [vmem:[%s226 + $0x190] sm:$0xff]
                %281 = vst [vmem:[%s227 + $0xd0] sm:$0xff] %v280
                %v282 = vld [vmem:[%s226 + $0x198] sm:$0xff]
                %283 = vst [vmem:[%s227 + $0xd8] sm:$0xff] %v282
                %v284 = vld [vmem:[%s226 + $0x1a0] sm:$0xff]
                %285 = vst [vmem:[%s227 + $0xe0] sm:$0xff] %v284
                %v286 = vld [vmem:[%s226 + $0x1a8] sm:$0xff]
                %287 = vst [vmem:[%s227 + $0xe8] sm:$0xff] %v286
                %v288 = vld [vmem:[%s226 + $0x1b0] sm:$0xff]
                %289 = vst [vmem:[%s227 + $0xf0] sm:$0xff] %v288
                %v290 = vld [vmem:[%s226 + $0x1b8] sm:$0xff]
                %291 = vst [vmem:[%s227 + $0xf8] sm:$0xff] %v290
                %v292 = vld [vmem:[%s226 + $0x200] sm:$0xff]
                %293 = vst [vmem:[%s227 + $0x100] sm:$0xff] %v292
                %v294 = vld [vmem:[%s226 + $0x208] sm:$0xff]
                %295 = vst [vmem:[%s227 + $0x108] sm:$0xff] %v294
                %v296 = vld [vmem:[%s226 + $0x210] sm:$0xff]
                %297 = vst [vmem:[%s227 + $0x110] sm:$0xff] %v296
                %v298 = vld [vmem:[%s226 + $0x218] sm:$0xff]
                %299 = vst [vmem:[%s227 + $0x118] sm:$0xff] %v298
                %v300 = vld [vmem:[%s226 + $0x220] sm:$0xff]
                %301 = vst [vmem:[%s227 + $0x120] sm:$0xff] %v300
                %v302 = vld [vmem:[%s226 + $0x228] sm:$0xff]
                %303 = vst [vmem:[%s227 + $0x128] sm:$0xff] %v302
                %v304 = vld [vmem:[%s226 + $0x230] sm:$0xff]
                %305 = vst [vmem:[%s227 + $0x130] sm:$0xff] %v304
                %v306 = vld [vmem:[%s226 + $0x238] sm:$0xff]
                %307 = vst [vmem:[%s227 + $0x138] sm:$0xff] %v306
              $region53: #{tpu_custom_call.1} parent=47 // loop_footer
                %s225 = sadd.s32 1, %s221
              $region54: #{tpu_custom_call.1} parent=47 // loop_footer_branch
                %220 = sbr.rel target = $region50
              $region55: #{tpu_custom_call.1} parent=47 // loop_exit
                _
            $region48: #{tpu_custom_call.1} parent=43 // pred_fallthru
              _
            // Predicated region
            $region56: #{tpu_custom_call.1} parent=43 // pred_check
              _
            $region57: #{tpu_custom_call.1} parent=43 // pred_check_branch
              %309 = sbr.rel target = $region59
            $region58: #{tpu_custom_call.1} parent=43 // pred_region
              _
            $region59: #{tpu_custom_call.1} parent=43 // pred_fallthru
              _
          $region44: #{tpu_custom_call.1} parent=39 // pred_fallthru
            _
          %310 = vnop
        $region40: #{tpu_custom_call.1} parent=35 // pred_fallthru
          _
      $region36: #{tpu_custom_call.1} parent=5 // pred_fallthru
        _
      %p311 = scmp.le.s32.totalorder 1, %s15
      %p312 = scmp.lt.s32.totalorder %s15, 3
      %p313 = pnand %p311, %p312
      %p314 = pneg %p313
      // Predicated region
      $region60: #{tpu_custom_call.1} parent=5 // pred_check
        _
      $region61: #{tpu_custom_call.1} parent=5 // pred_check_branch
        %316 = sbr.rel (%p313) target = $region63
      $region62: #{tpu_custom_call.1} parent=5 // pred_region
        %s317 = ssub.s32 %s15, 1
        %s318 = sand.u32 %s28, 1
        %s319 = sand.u32 %s28, 1
        %s320 = smul.addr %s319, 320
        %s321 = scalar_lea.vmem [#allocation2], %s320
        // Predicated region
        $region64: #{tpu_custom_call.1} parent=62 // pred_check
          %p322 = pneg %p41
        $region65: #{tpu_custom_call.1} parent=62 // pred_check_branch
          %324 = sbr.rel (%p322) target = $region67
        $region66: #{tpu_custom_call.1} parent=62 // pred_region
          _
        $region67: #{tpu_custom_call.1} parent=62 // pred_fallthru
          _
        %s325 = sand.u32 %s28, 1
        %s326 = sand.u32 %s28, 1
        %s327 = smul.addr %s326, 320
        %s328 = scalar_lea.vmem [#allocation2], %s327
        %p329 = pneg %p41
        %p330 = pneg %p38
        %p331 = pneg %p62
        %p332 = pneg %p59
        %p333 = pneg %p83
        %p334 = pneg %p80
        %p335 = pneg %p104
        %p336 = pneg %p101
        %p337 = pneg %p125
        %p338 = pneg %p122
        %p339 = pneg %p146
        %p340 = pneg %p143
        %p341 = pneg %p172
        %p342 = pneg %p169
        %s343 = sand.u32 %s159, 1
        %s344 = scalar_lea.sflag [#allocation4], %s343
        %s345 = sand.u32 %s159, 1
        %s346 = smul.addr %s345, 8
        %s347 = scalar_lea.vmem [#allocation3], %s346
        %s348 = smul.u32 16, %s20
        %v350 = vld [vmem:[%s1] sm:$0xf]
        %v351 = vld [vmem:[%s1 + $0x4] sm:$0xf]
        %v352 = vld [vmem:[%s1 + $0x8] sm:$0xf]
        %v353 = vld [vmem:[%s1 + $0xc] sm:$0xf]
        %v354 = vld [vmem:[%s321] sm:$0xff]
        %v355 = vld [vmem:[%s321 + $0x8] sm:$0xff]
        %v356 = vld [vmem:[%s321 + $0x10] sm:$0xff]
        %v357 = vld [vmem:[%s321 + $0x18] sm:$0xff]
        %v358 = vld [vmem:[%s321 + $0x20] sm:$0xff]
        %v359 = vld [vmem:[%s321 + $0x28] sm:$0xff]
        %v360 = vld [vmem:[%s321 + $0x30] sm:$0xff]
        %v361 = vld [vmem:[%s321 + $0x38] sm:$0xff]
        %v362 = vld [vmem:[%s321 + $0x40] sm:$0xff]
        %v363 = vld [vmem:[%s321 + $0x48] sm:$0xff]
        %v364 = vld [vmem:[%s321 + $0x50] sm:$0xff]
        %v365 = vld [vmem:[%s321 + $0x58] sm:$0xff]
        %v366 = vld [vmem:[%s321 + $0x60] sm:$0xff]
        %v367 = vld [vmem:[%s321 + $0x68] sm:$0xff]
        %v368 = vld [vmem:[%s321 + $0x70] sm:$0xff]
        %v369 = vld [vmem:[%s321 + $0x78] sm:$0xff]
        %v370 = vld [vmem:[%s321 + $0x80] sm:$0xff]
        %v371 = vld [vmem:[%s321 + $0x88] sm:$0xff]
        %v372 = vld [vmem:[%s321 + $0x90] sm:$0xff]
        %v373 = vld [vmem:[%s321 + $0x98] sm:$0xff]
        %v374 = vld [vmem:[%s321 + $0xa0] sm:$0xff]
        %v375 = vld [vmem:[%s321 + $0xa8] sm:$0xff]
        %v376 = vld [vmem:[%s321 + $0xb0] sm:$0xff]
        %v377 = vld [vmem:[%s321 + $0xb8] sm:$0xff]
        %v378 = vld [vmem:[%s321 + $0xc0] sm:$0xff]
        %v379 = vld [vmem:[%s321 + $0xc8] sm:$0xff]
        %v380 = vld [vmem:[%s321 + $0xd0] sm:$0xff]
        %v381 = vld [vmem:[%s321 + $0xd8] sm:$0xff]
        %v382 = vld [vmem:[%s321 + $0xe0] sm:$0xff]
        %v383 = vld [vmem:[%s321 + $0xe8] sm:$0xff]
        %v384 = vld [vmem:[%s321 + $0xf0] sm:$0xff]
        %v385 = vld [vmem:[%s321 + $0xf8] sm:$0xff]
        %v386 = vld [vmem:[%s321 + $0x100] sm:$0x33]
        %v387 = vld [vmem:[%s321 + $0x108] sm:$0x33]
        %v388 = vld [vmem:[%s321 + $0x110] sm:$0x33]
        %v389 = vld [vmem:[%s321 + $0x118] sm:$0x33]
        %v390 = vld [vmem:[%s321 + $0x120] sm:$0x33]
        %v391 = vld [vmem:[%s321 + $0x128] sm:$0x33]
        %v392 = vld [vmem:[%s321 + $0x130] sm:$0x33]
        %v393 = vld [vmem:[%s321 + $0x138] sm:$0x33]
        %v394 = vld [vmem:[%s2] sm:$0xff]
        %v395 = vld [vmem:[%s2 + $0x8] sm:$0xff]
        %v396 = vld [vmem:[%s2 + $0x10] sm:$0xff]
        %v397 = vld [vmem:[%s2 + $0x18] sm:$0xff]
        %399 = vset.pattern.permute.xlu0 0
        %400 = vperm.xlu0 %399, %v394
        %v401 = vpop.permute.xlu0 %400
        %404 = vset.pattern.permute.xlu0 0
        %405 = vperm.xlu0 %404, %v395
        %v406 = vpop.permute.xlu0 %405
        %409 = vset.pattern.permute.xlu0 0
        %410 = vperm.xlu0 %409, %v396
        %v411 = vpop.permute.xlu0 %410
        %414 = vset.pattern.permute.xlu0 0
        %415 = vperm.xlu0 %414, %v397
        %v416 = vpop.permute.xlu0 %415
        %v422 = vunpack.c.l.b16 %v350
        %v423 = vunpack.c.l.b16 %v351
        %v424 = vunpack.c.l.b16 %v352
        %v425 = vunpack.c.l.b16 %v353
        %v426 = vpack.c.b16 %v423, %v422
        %v427 = vpack.c.b16 %v425, %v424
        %v468 = vunpack.c.l.b16 %v354
        %v469 = vunpack.c.h.b16 %v354
        %v470 = vunpack.c.l.b16 %v355
        %v471 = vunpack.c.h.b16 %v355
        %v472 = vunpack.c.l.b16 %v356
        %v473 = vunpack.c.h.b16 %v356
        %v474 = vunpack.c.l.b16 %v357
        %v475 = vunpack.c.h.b16 %v357
        %v476 = vunpack.c.l.b16 %v358
        %v477 = vunpack.c.h.b16 %v358
        %v478 = vunpack.c.l.b16 %v359
        %v479 = vunpack.c.h.b16 %v359
        %v480 = vunpack.c.l.b16 %v360
        %v481 = vunpack.c.h.b16 %v360
        %v482 = vunpack.c.l.b16 %v361
        %v483 = vunpack.c.h.b16 %v361
        %v484 = vunpack.c.l.b16 %v362
        %v485 = vunpack.c.h.b16 %v362
        %v486 = vunpack.c.l.b16 %v363
        %v487 = vunpack.c.h.b16 %v363
        %v488 = vunpack.c.l.b16 %v364
        %v489 = vunpack.c.h.b16 %v364
        %v490 = vunpack.c.l.b16 %v365
        %v491 = vunpack.c.h.b16 %v365
        %v492 = vunpack.c.l.b16 %v366
        %v493 = vunpack.c.h.b16 %v366
        %v494 = vunpack.c.l.b16 %v367
        %v495 = vunpack.c.h.b16 %v367
        %v496 = vunpack.c.l.b16 %v368
        %v497 = vunpack.c.h.b16 %v368
        %v498 = vunpack.c.l.b16 %v369
        %v499 = vunpack.c.h.b16 %v369
        %v500 = vunpack.c.l.b16 %v370
        %v501 = vunpack.c.h.b16 %v370
        %v502 = vunpack.c.l.b16 %v371
        %v503 = vunpack.c.h.b16 %v371
        %v504 = vunpack.c.l.b16 %v372
        %v505 = vunpack.c.h.b16 %v372
        %v506 = vunpack.c.l.b16 %v373
        %v507 = vunpack.c.h.b16 %v373
        %v508 = vunpack.c.l.b16 %v374
        %v509 = vunpack.c.h.b16 %v374
        %v510 = vunpack.c.l.b16 %v375
        %v511 = vunpack.c.h.b16 %v375
        %v512 = vunpack.c.l.b16 %v376
        %v513 = vunpack.c.h.b16 %v376
        %v514 = vunpack.c.l.b16 %v377
        %v515 = vunpack.c.h.b16 %v377
        %v516 = vunpack.c.l.b16 %v378
        %v517 = vunpack.c.h.b16 %v378
        %v518 = vunpack.c.l.b16 %v379
        %v519 = vunpack.c.h.b16 %v379
        %v520 = vunpack.c.l.b16 %v380
        %v521 = vunpack.c.h.b16 %v380
        %v522 = vunpack.c.l.b16 %v381
        %v523 = vunpack.c.h.b16 %v381
        %v524 = vunpack.c.l.b16 %v382
        %v525 = vunpack.c.h.b16 %v382
        %v526 = vunpack.c.l.b16 %v383
        %v527 = vunpack.c.h.b16 %v383
        %v528 = vunpack.c.l.b16 %v384
        %v529 = vunpack.c.h.b16 %v384
        %v530 = vunpack.c.l.b16 %v385
        %v531 = vunpack.c.h.b16 %v385
        %v532 = vunpack.c.l.b16 %v386
        %v533 = vunpack.c.h.b16 %v386
        %v534 = vunpack.c.l.b16 %v387
        %v535 = vunpack.c.h.b16 %v387
        %v536 = vunpack.c.l.b16 %v388
        %v537 = vunpack.c.h.b16 %v388
        %v538 = vunpack.c.l.b16 %v389
        %v539 = vunpack.c.h.b16 %v389
        %v540 = vunpack.c.l.b16 %v390
        %v541 = vunpack.c.h.b16 %v390
        %v542 = vunpack.c.l.b16 %v391
        %v543 = vunpack.c.h.b16 %v391
        %v544 = vunpack.c.l.b16 %v392
        %v545 = vunpack.c.h.b16 %v392
        %v546 = vunpack.c.l.b16 %v393
        %v547 = vunpack.c.h.b16 %v393
        %v548 = vpack.c.b16 %v484, %v468
        %v549 = vpack.c.b16 %v485, %v469
        %v550 = vpack.c.b16 %v486, %v470
        %v551 = vpack.c.b16 %v487, %v471
        %v552 = vpack.c.b16 %v488, %v472
        %v553 = vpack.c.b16 %v489, %v473
        %v554 = vpack.c.b16 %v490, %v474
        %v555 = vpack.c.b16 %v491, %v475
        %v556 = vpack.c.b16 %v492, %v476
        %v557 = vpack.c.b16 %v493, %v477
        %v558 = vpack.c.b16 %v494, %v478
        %v559 = vpack.c.b16 %v495, %v479
        %v560 = vpack.c.b16 %v496, %v480
        %v561 = vpack.c.b16 %v497, %v481
        %v562 = vpack.c.b16 %v498, %v482
        %v563 = vpack.c.b16 %v499, %v483
        %v564 = vpack.c.b16 %v516, %v500
        %v565 = vpack.c.b16 %v517, %v501
        %v566 = vpack.c.b16 %v518, %v502
        %v567 = vpack.c.b16 %v519, %v503
        %v568 = vpack.c.b16 %v520, %v504
        %v569 = vpack.c.b16 %v521, %v505
        %v570 = vpack.c.b16 %v522, %v506
        %v571 = vpack.c.b16 %v523, %v507
        %v572 = vpack.c.b16 %v524, %v508
        %v573 = vpack.c.b16 %v525, %v509
        %v574 = vpack.c.b16 %v526, %v510
        %v575 = vpack.c.b16 %v527, %v511
        %v576 = vpack.c.b16 %v528, %v512
        %v577 = vpack.c.b16 %v529, %v513
        %v578 = vpack.c.b16 %v530, %v514
        %v579 = vpack.c.b16 %v531, %v515
        %v580 = vpack.c.b16 %v532, %v532
        %v581 = vpack.c.b16 %v533, %v533
        %v582 = vpack.c.b16 %v534, %v534
        %v583 = vpack.c.b16 %v535, %v535
        %v584 = vpack.c.b16 %v536, %v536
        %v585 = vpack.c.b16 %v537, %v537
        %v586 = vpack.c.b16 %v538, %v538
        %v587 = vpack.c.b16 %v539, %v539
        %v588 = vpack.c.b16 %v540, %v540
        %v589 = vpack.c.b16 %v541, %v541
        %v590 = vpack.c.b16 %v542, %v542
        %v591 = vpack.c.b16 %v543, %v543
        %v592 = vpack.c.b16 %v544, %v544
        %v593 = vpack.c.b16 %v545, %v545
        %v594 = vpack.c.b16 %v546, %v546
        %v595 = vpack.c.b16 %v547, %v547
        %vm628 = vcmask 293888
        %v630 = vsel %vm628, %v426, 0
        %v633 = vsel %vm628, %v427, 0
        %vm635 = vcmask 1041408
        %v637 = vsel %vm635, %v580, 0
        %v640 = vsel %vm635, %v581, 0
        %v643 = vsel %vm635, %v582, 0
        %v646 = vsel %vm635, %v583, 0
        %v649 = vsel %vm635, %v584, 0
        %v652 = vsel %vm635, %v585, 0
        %v655 = vsel %vm635, %v586, 0
        %v658 = vsel %vm635, %v587, 0
        %v661 = vsel %vm635, %v588, 0
        %v664 = vsel %vm635, %v589, 0
        %v667 = vsel %vm635, %v590, 0
        %v670 = vsel %vm635, %v591, 0
        %v673 = vsel %vm635, %v592, 0
        %v676 = vsel %vm635, %v593, 0
        %v679 = vsel %vm635, %v594, 0
        %v682 = vsel %vm635, %v595, 0
        %684 = vmatpush.bf16.msra.mxu0 0
        %685 = vmatpush.bf16.msra.mxu0 0
        %686 = vmatpush.bf16.msra.mxu0 0
        %687 = vmatpush.bf16.msra.mxu0 0
        %688 = vmatpush.bf16.msra.mxu0 0
        %689 = vmatpush.bf16.msra.mxu0 %v637
        %690 = vmatpush.bf16.msra.mxu0 %v564
        %691 = vmatpush.bf16.msra.mxu0 %v548
        %692 = vmatmul.bf16.gmra.mxu0 %v630
        %v693 = vpop.f32.mrf.mxu0
        %v694 = vadd.f32 %v401, %v693
        %v695 = vpop.f32.mrf.mxu0
        %v696 = vadd.f32 %v406, %v695
        %697 = vmatmul.bf16.gmra.mxu0 %v633
        %v698 = vpop.f32.mrf.mxu0
        %v699 = vadd.f32 %v411, %v698
        %v700 = vpop.f32.mrf.mxu0
        %v701 = vadd.f32 %v416, %v700
        %702 = vdwg.mxu0
        %703 = vmatpush.bf16.msra.mxu0 0
        %704 = vmatpush.bf16.msra.mxu0 0
        %705 = vmatpush.bf16.msra.mxu0 0
        %706 = vmatpush.bf16.msra.mxu0 0
        %707 = vmatpush.bf16.msra.mxu0 0
        %708 = vmatpush.bf16.msra.mxu0 %v640
        %709 = vmatpush.bf16.msra.mxu0 %v565
        %710 = vmatpush.bf16.msra.mxu0 %v549
        %711 = vmatmul.bf16.gmra.mxu0 %v630
        %v712 = vpop.f32.mrf.mxu0
        %v713 = vadd.f32 %v401, %v712
        %v714 = vpop.f32.mrf.mxu0
        %v715 = vadd.f32 %v406, %v714
        %716 = vmatmul.bf16.gmra.mxu0 %v633
        %v717 = vpop.f32.mrf.mxu0
        %v718 = vadd.f32 %v411, %v717
        %v719 = vpop.f32.mrf.mxu0
        %v720 = vadd.f32 %v416, %v719
        %721 = vdwg.mxu0
        %722 = vmatpush.bf16.msra.mxu0 0
        %723 = vmatpush.bf16.msra.mxu0 0
        %724 = vmatpush.bf16.msra.mxu0 0
        %725 = vmatpush.bf16.msra.mxu0 0
        %726 = vmatpush.bf16.msra.mxu0 0
        %727 = vmatpush.bf16.msra.mxu0 %v643
        %728 = vmatpush.bf16.msra.mxu0 %v566
        %729 = vmatpush.bf16.msra.mxu0 %v550
        %730 = vmatmul.bf16.gmra.mxu0 %v630
        %v731 = vpop.f32.mrf.mxu0
        %v732 = vadd.f32 %v401, %v731
        %v733 = vpop.f32.mrf.mxu0
        %v734 = vadd.f32 %v406, %v733
        %735 = vmatmul.bf16.gmra.mxu0 %v633
        %v736 = vpop.f32.mrf.mxu0
        %v737 = vadd.f32 %v411, %v736
        %v738 = vpop.f32.mrf.mxu0
        %v739 = vadd.f32 %v416, %v738
        %740 = vdwg.mxu0
        %741 = vmatpush.bf16.msra.mxu0 0
        %742 = vmatpush.bf16.msra.mxu0 0
        %743 = vmatpush.bf16.msra.mxu0 0
        %744 = vmatpush.bf16.msra.mxu0 0
        %745 = vmatpush.bf16.msra.mxu0 0
        %746 = vmatpush.bf16.msra.mxu0 %v646
        %747 = vmatpush.bf16.msra.mxu0 %v567
        %748 = vmatpush.bf16.msra.mxu0 %v551
        %749 = vmatmul.bf16.gmra.mxu0 %v630
        %v750 = vpop.f32.mrf.mxu0
        %v751 = vadd.f32 %v401, %v750
        %v752 = vpop.f32.mrf.mxu0
        %v753 = vadd.f32 %v406, %v752
        %754 = vmatmul.bf16.gmra.mxu0 %v633
        %v755 = vpop.f32.mrf.mxu0
        %v756 = vadd.f32 %v411, %v755
        %v757 = vpop.f32.mrf.mxu0
        %v758 = vadd.f32 %v416, %v757
        %759 = vdwg.mxu0
        %760 = vmatpush.bf16.msra.mxu0 0
        %761 = vmatpush.bf16.msra.mxu0 0
        %762 = vmatpush.bf16.msra.mxu0 0
        %763 = vmatpush.bf16.msra.mxu0 0
        %764 = vmatpush.bf16.msra.mxu0 0
        %765 = vmatpush.bf16.msra.mxu0 %v649
        %766 = vmatpush.bf16.msra.mxu0 %v568
        %767 = vmatpush.bf16.msra.mxu0 %v552
        %768 = vmatmul.bf16.gmra.mxu0 %v630
        %v769 = vpop.f32.mrf.mxu0
        %v770 = vadd.f32 %v401, %v769
        %v771 = vpop.f32.mrf.mxu0
        %v772 = vadd.f32 %v406, %v771
        %773 = vmatmul.bf16.gmra.mxu0 %v633
        %v774 = vpop.f32.mrf.mxu0
        %v775 = vadd.f32 %v411, %v774
        %v776 = vpop.f32.mrf.mxu0
        %v777 = vadd.f32 %v416, %v776
        %778 = vdwg.mxu0
        %779 = vmatpush.bf16.msra.mxu0 0
        %780 = vmatpush.bf16.msra.mxu0 0
        %781 = vmatpush.bf16.msra.mxu0 0
        %782 = vmatpush.bf16.msra.mxu0 0
        %783 = vmatpush.bf16.msra.mxu0 0
        %784 = vmatpush.bf16.msra.mxu0 %v652
        %785 = vmatpush.bf16.msra.mxu0 %v569
        %786 = vmatpush.bf16.msra.mxu0 %v553
        %787 = vmatmul.bf16.gmra.mxu0 %v630
        %v788 = vpop.f32.mrf.mxu0
        %v789 = vadd.f32 %v401, %v788
        %v790 = vpop.f32.mrf.mxu0
        %v791 = vadd.f32 %v406, %v790
        %792 = vmatmul.bf16.gmra.mxu0 %v633
        %v793 = vpop.f32.mrf.mxu0
        %v794 = vadd.f32 %v411, %v793
        %v795 = vpop.f32.mrf.mxu0
        %v796 = vadd.f32 %v416, %v795
        %797 = vdwg.mxu0
        %798 = vmatpush.bf16.msra.mxu0 0
        %799 = vmatpush.bf16.msra.mxu0 0
        %800 = vmatpush.bf16.msra.mxu0 0
        %801 = vmatpush.bf16.msra.mxu0 0
        %802 = vmatpush.bf16.msra.mxu0 0
        %803 = vmatpush.bf16.msra.mxu0 %v655
        %804 = vmatpush.bf16.msra.mxu0 %v570
        %805 = vmatpush.bf16.msra.mxu0 %v554
        %806 = vmatmul.bf16.gmra.mxu0 %v630
        %v807 = vpop.f32.mrf.mxu0
        %v808 = vadd.f32 %v401, %v807
        %v809 = vpop.f32.mrf.mxu0
        %v810 = vadd.f32 %v406, %v809
        %811 = vmatmul.bf16.gmra.mxu0 %v633
        %v812 = vpop.f32.mrf.mxu0
        %v813 = vadd.f32 %v411, %v812
        %v814 = vpop.f32.mrf.mxu0
        %v815 = vadd.f32 %v416, %v814
        %816 = vdwg.mxu0
        %817 = vmatpush.bf16.msra.mxu0 0
        %818 = vmatpush.bf16.msra.mxu0 0
        %819 = vmatpush.bf16.msra.mxu0 0
        %820 = vmatpush.bf16.msra.mxu0 0
        %821 = vmatpush.bf16.msra.mxu0 0
        %822 = vmatpush.bf16.msra.mxu0 %v658
        %823 = vmatpush.bf16.msra.mxu0 %v571
        %824 = vmatpush.bf16.msra.mxu0 %v555
        %825 = vmatmul.bf16.gmra.mxu0 %v630
        %v826 = vpop.f32.mrf.mxu0
        %v827 = vadd.f32 %v401, %v826
        %v828 = vpop.f32.mrf.mxu0
        %v829 = vadd.f32 %v406, %v828
        %830 = vmatmul.bf16.gmra.mxu0 %v633
        %v831 = vpop.f32.mrf.mxu0
        %v832 = vadd.f32 %v411, %v831
        %v833 = vpop.f32.mrf.mxu0
        %v834 = vadd.f32 %v416, %v833
        %835 = vdwg.mxu0
        %836 = vmatpush.bf16.msra.mxu0 0
        %837 = vmatpush.bf16.msra.mxu0 0
        %838 = vmatpush.bf16.msra.mxu0 0
        %839 = vmatpush.bf16.msra.mxu0 0
        %840 = vmatpush.bf16.msra.mxu0 0
        %841 = vmatpush.bf16.msra.mxu0 %v661
        %842 = vmatpush.bf16.msra.mxu0 %v572
        %843 = vmatpush.bf16.msra.mxu0 %v556
        %844 = vmatmul.bf16.gmra.mxu0 %v630
        %v845 = vpop.f32.mrf.mxu0
        %v846 = vadd.f32 %v401, %v845
        %v847 = vpop.f32.mrf.mxu0
        %v848 = vadd.f32 %v406, %v847
        %849 = vmatmul.bf16.gmra.mxu0 %v633
        %v850 = vpop.f32.mrf.mxu0
        %v851 = vadd.f32 %v411, %v850
        %v852 = vpop.f32.mrf.mxu0
        %v853 = vadd.f32 %v416, %v852
        %854 = vdwg.mxu0
        %855 = vmatpush.bf16.msra.mxu0 0
        %856 = vmatpush.bf16.msra.mxu0 0
        %857 = vmatpush.bf16.msra.mxu0 0
        %858 = vmatpush.bf16.msra.mxu0 0
        %859 = vmatpush.bf16.msra.mxu0 0
        %860 = vmatpush.bf16.msra.mxu0 %v664
        %861 = vmatpush.bf16.msra.mxu0 %v573
        %862 = vmatpush.bf16.msra.mxu0 %v557
        %863 = vmatmul.bf16.gmra.mxu0 %v630
        %v864 = vpop.f32.mrf.mxu0
        %v865 = vadd.f32 %v401, %v864
        %v866 = vpop.f32.mrf.mxu0
        %v867 = vadd.f32 %v406, %v866
        %868 = vmatmul.bf16.gmra.mxu0 %v633
        %v869 = vpop.f32.mrf.mxu0
        %v870 = vadd.f32 %v411, %v869
        %v871 = vpop.f32.mrf.mxu0
        %v872 = vadd.f32 %v416, %v871
        %873 = vdwg.mxu0
        %874 = vmatpush.bf16.msra.mxu0 0
        %875 = vmatpush.bf16.msra.mxu0 0
        %876 = vmatpush.bf16.msra.mxu0 0
        %877 = vmatpush.bf16.msra.mxu0 0
        %878 = vmatpush.bf16.msra.mxu0 0
        %879 = vmatpush.bf16.msra.mxu0 %v667
        %880 = vmatpush.bf16.msra.mxu0 %v574
        %881 = vmatpush.bf16.msra.mxu0 %v558
        %882 = vmatmul.bf16.gmra.mxu0 %v630
        %v883 = vpop.f32.mrf.mxu0
        %v884 = vadd.f32 %v401, %v883
        %v885 = vpop.f32.mrf.mxu0
        %v886 = vadd.f32 %v406, %v885
        %887 = vmatmul.bf16.gmra.mxu0 %v633
        %v888 = vpop.f32.mrf.mxu0
        %v889 = vadd.f32 %v411, %v888
        %v890 = vpop.f32.mrf.mxu0
        %v891 = vadd.f32 %v416, %v890
        %892 = vdwg.mxu0
        %893 = vmatpush.bf16.msra.mxu0 0
        %894 = vmatpush.bf16.msra.mxu0 0
        %895 = vmatpush.bf16.msra.mxu0 0
        %896 = vmatpush.bf16.msra.mxu0 0
        %897 = vmatpush.bf16.msra.mxu0 0
        %898 = vmatpush.bf16.msra.mxu0 %v670
        %899 = vmatpush.bf16.msra.mxu0 %v575
        %900 = vmatpush.bf16.msra.mxu0 %v559
        %901 = vmatmul.bf16.gmra.mxu0 %v630
        %v902 = vpop.f32.mrf.mxu0
        %v903 = vadd.f32 %v401, %v902
        %v904 = vpop.f32.mrf.mxu0
        %v905 = vadd.f32 %v406, %v904
        %906 = vmatmul.bf16.gmra.mxu0 %v633
        %v907 = vpop.f32.mrf.mxu0
        %v908 = vadd.f32 %v411, %v907
        %v909 = vpop.f32.mrf.mxu0
        %v910 = vadd.f32 %v416, %v909
        %911 = vdwg.mxu0
        %912 = vmatpush.bf16.msra.mxu0 0
        %913 = vmatpush.bf16.msra.mxu0 0
        %914 = vmatpush.bf16.msra.mxu0 0
        %915 = vmatpush.bf16.msra.mxu0 0
        %916 = vmatpush.bf16.msra.mxu0 0
        %917 = vmatpush.bf16.msra.mxu0 %v673
        %918 = vmatpush.bf16.msra.mxu0 %v576
        %919 = vmatpush.bf16.msra.mxu0 %v560
        %920 = vmatmul.bf16.gmra.mxu0 %v630
        %v921 = vpop.f32.mrf.mxu0
        %v922 = vadd.f32 %v401, %v921
        %v923 = vpop.f32.mrf.mxu0
        %v924 = vadd.f32 %v406, %v923
        %925 = vmatmul.bf16.gmra.mxu0 %v633
        %v926 = vpop.f32.mrf.mxu0
        %v927 = vadd.f32 %v411, %v926
        %v928 = vpop.f32.mrf.mxu0
        %v929 = vadd.f32 %v416, %v928
        %930 = vdwg.mxu0
        %931 = vmatpush.bf16.msra.mxu0 0
        %932 = vmatpush.bf16.msra.mxu0 0
        %933 = vmatpush.bf16.msra.mxu0 0
        %934 = vmatpush.bf16.msra.mxu0 0
        %935 = vmatpush.bf16.msra.mxu0 0
        %936 = vmatpush.bf16.msra.mxu0 %v676
        %937 = vmatpush.bf16.msra.mxu0 %v577
        %938 = vmatpush.bf16.msra.mxu0 %v561
        %939 = vmatmul.bf16.gmra.mxu0 %v630
        %v940 = vpop.f32.mrf.mxu0
        %v941 = vadd.f32 %v401, %v940
        %v942 = vpop.f32.mrf.mxu0
        %v943 = vadd.f32 %v406, %v942
        %944 = vmatmul.bf16.gmra.mxu0 %v633
        %v945 = vpop.f32.mrf.mxu0
        %v946 = vadd.f32 %v411, %v945
        %v947 = vpop.f32.mrf.mxu0
        %v948 = vadd.f32 %v416, %v947
        %949 = vdwg.mxu0
        %950 = vmatpush.bf16.msra.mxu0 0
        %951 = vmatpush.bf16.msra.mxu0 0
        %952 = vmatpush.bf16.msra.mxu0 0
        %953 = vmatpush.bf16.msra.mxu0 0
        %954 = vmatpush.bf16.msra.mxu0 0
        %955 = vmatpush.bf16.msra.mxu0 %v679
        %956 = vmatpush.bf16.msra.mxu0 %v578
        %957 = vmatpush.bf16.msra.mxu0 %v562
        %958 = vmatmul.bf16.gmra.mxu0 %v630
        %v959 = vpop.f32.mrf.mxu0
        %v960 = vadd.f32 %v401, %v959
        %v961 = vpop.f32.mrf.mxu0
        %v962 = vadd.f32 %v406, %v961
        %963 = vmatmul.bf16.gmra.mxu0 %v633
        %v964 = vpop.f32.mrf.mxu0
        %v965 = vadd.f32 %v411, %v964
        %v966 = vpop.f32.mrf.mxu0
        %v967 = vadd.f32 %v416, %v966
        %968 = vdwg.mxu0
        %969 = vmatpush.bf16.msra.mxu0 0
        %970 = vmatpush.bf16.msra.mxu0 0
        %971 = vmatpush.bf16.msra.mxu0 0
        %972 = vmatpush.bf16.msra.mxu0 0
        %973 = vmatpush.bf16.msra.mxu0 0
        %974 = vmatpush.bf16.msra.mxu0 %v682
        %975 = vmatpush.bf16.msra.mxu0 %v579
        %976 = vmatpush.bf16.msra.mxu0 %v563
        %977 = vmatmul.bf16.gmra.mxu0 %v630
        %v978 = vpop.f32.mrf.mxu0
        %v979 = vadd.f32 %v401, %v978
        %v980 = vpop.f32.mrf.mxu0
        %v981 = vadd.f32 %v406, %v980
        %982 = vmatmul.bf16.gmra.mxu0 %v633
        %v983 = vpop.f32.mrf.mxu0
        %v984 = vadd.f32 %v411, %v983
        %v985 = vpop.f32.mrf.mxu0
        %v986 = vadd.f32 %v416, %v985
        %987 = vdwg.mxu0
        %v988 = vmax.f32 %v694, 0.0
        %v989 = vmax.f32 %v713, 0.0
        %v990 = vmax.f32 %v732, 0.0
        %v991 = vmax.f32 %v751, 0.0
        %v992 = vmax.f32 %v770, 0.0
        %v993 = vmax.f32 %v789, 0.0
        %v994 = vmax.f32 %v808, 0.0
        %v995 = vmax.f32 %v827, 0.0
        %v996 = vmax.f32 %v846, 0.0
        %v997 = vmax.f32 %v865, 0.0
        %v998 = vmax.f32 %v884, 0.0
        %v999 = vmax.f32 %v903, 0.0
        %v1000 = vmax.f32 %v922, 0.0
        %v1001 = vmax.f32 %v941, 0.0
        %v1002 = vmax.f32 %v960, 0.0
        %v1003 = vmax.f32 %v979, 0.0
        %v1004 = vmax.f32 %v696, 0.0
        %v1005 = vmax.f32 %v715, 0.0
        %v1006 = vmax.f32 %v734, 0.0
        %v1007 = vmax.f32 %v753, 0.0
        %v1008 = vmax.f32 %v772, 0.0
        %v1009 = vmax.f32 %v791, 0.0
        %v1010 = vmax.f32 %v810, 0.0
        %v1011 = vmax.f32 %v829, 0.0
        %v1012 = vmax.f32 %v848, 0.0
        %v1013 = vmax.f32 %v867, 0.0
        %v1014 = vmax.f32 %v886, 0.0
        %v1015 = vmax.f32 %v905, 0.0
        %v1016 = vmax.f32 %v924, 0.0
        %v1017 = vmax.f32 %v943, 0.0
        %v1018 = vmax.f32 %v962, 0.0
        %v1019 = vmax.f32 %v981, 0.0
        %v1020 = vmax.f32 %v699, 0.0
        %v1021 = vmax.f32 %v718, 0.0
        %v1022 = vmax.f32 %v737, 0.0
        %v1023 = vmax.f32 %v756, 0.0
        %v1024 = vmax.f32 %v775, 0.0
        %v1025 = vmax.f32 %v794, 0.0
        %v1026 = vmax.f32 %v813, 0.0
        %v1027 = vmax.f32 %v832, 0.0
        %v1028 = vmax.f32 %v851, 0.0
        %v1029 = vmax.f32 %v870, 0.0
        %v1030 = vmax.f32 %v889, 0.0
        %v1031 = vmax.f32 %v908, 0.0
        %v1032 = vmax.f32 %v927, 0.0
        %v1033 = vmax.f32 %v946, 0.0
        %v1034 = vmax.f32 %v965, 0.0
        %v1035 = vmax.f32 %v984, 0.0
        %v1036 = vmax.f32 %v701, 0.0
        %v1037 = vmax.f32 %v720, 0.0
        %v1038 = vmax.f32 %v739, 0.0
        %v1039 = vmax.f32 %v758, 0.0
        %v1040 = vmax.f32 %v777, 0.0
        %v1041 = vmax.f32 %v796, 0.0
        %v1042 = vmax.f32 %v815, 0.0
        %v1043 = vmax.f32 %v834, 0.0
        %v1044 = vmax.f32 %v853, 0.0
        %v1045 = vmax.f32 %v872, 0.0
        %v1046 = vmax.f32 %v891, 0.0
        %v1047 = vmax.f32 %v910, 0.0
        %v1048 = vmax.f32 %v929, 0.0
        %v1049 = vmax.f32 %v948, 0.0
        %v1050 = vmax.f32 %v967, 0.0
        %v1051 = vmax.f32 %v986, 0.0
        %v1052 = vld [vmem:[%s3] sm:$0xff]
        %v1053 = vld [vmem:[%s3 + $0x8] sm:$0xff]
        %v1054 = vld [vmem:[%s3 + $0x10] sm:$0xff]
        %v1055 = vld [vmem:[%s3 + $0x18] sm:$0xff]
        %v1056 = vld [vmem:[%s3 + $0x20] sm:$0xff]
        %v1057 = vld [vmem:[%s3 + $0x28] sm:$0xff]
        %v1058 = vld [vmem:[%s3 + $0x30] sm:$0xff]
        %v1059 = vld [vmem:[%s3 + $0x38] sm:$0xff]
        %v1060 = vld [vmem:[%s3 + $0x40] sm:$0xff]
        %v1061 = vld [vmem:[%s3 + $0x48] sm:$0xff]
        %v1062 = vld [vmem:[%s3 + $0x50] sm:$0xff]
        %v1063 = vld [vmem:[%s3 + $0x58] sm:$0xff]
        %v1064 = vld [vmem:[%s3 + $0x60] sm:$0xff]
        %v1065 = vld [vmem:[%s3 + $0x68] sm:$0xff]
        %v1066 = vld [vmem:[%s3 + $0x70] sm:$0xff]
        %v1067 = vld [vmem:[%s3 + $0x78] sm:$0xff]
        %v1068 = vld [vmem:[%s3 + $0x80] sm:$0xff]
        %v1069 = vld [vmem:[%s3 + $0x88] sm:$0xff]
        %v1070 = vld [vmem:[%s3 + $0x90] sm:$0xff]
        %v1071 = vld [vmem:[%s3 + $0x98] sm:$0xff]
        %v1072 = vld [vmem:[%s3 + $0xa0] sm:$0xff]
        %v1073 = vld [vmem:[%s3 + $0xa8] sm:$0xff]
        %v1074 = vld [vmem:[%s3 + $0xb0] sm:$0xff]
        %v1075 = vld [vmem:[%s3 + $0xb8] sm:$0xff]
        %v1076 = vld [vmem:[%s3 + $0xc0] sm:$0xff]
        %v1077 = vld [vmem:[%s3 + $0xc8] sm:$0xff]
        %v1078 = vld [vmem:[%s3 + $0xd0] sm:$0xff]
        %v1079 = vld [vmem:[%s3 + $0xd8] sm:$0xff]
        %v1080 = vld [vmem:[%s3 + $0xe0] sm:$0xff]
        %v1081 = vld [vmem:[%s3 + $0xe8] sm:$0xff]
        %v1082 = vld [vmem:[%s3 + $0xf0] sm:$0xff]
        %v1083 = vld [vmem:[%s3 + $0xf8] sm:$0xff]
        %v1084 = vld [vmem:[%s3 + $0x100] sm:$0xff]
        %v1085 = vld [vmem:[%s3 + $0x108] sm:$0xff]
        %v1086 = vld [vmem:[%s3 + $0x110] sm:$0xff]
        %v1087 = vld [vmem:[%s3 + $0x118] sm:$0xff]
        %v1088 = vld [vmem:[%s3 + $0x120] sm:$0xff]
        %v1089 = vld [vmem:[%s3 + $0x128] sm:$0xff]
        %v1090 = vld [vmem:[%s3 + $0x130] sm:$0xff]
        %v1091 = vld [vmem:[%s3 + $0x138] sm:$0xff]
        %v1092 = vld [vmem:[%s3 + $0x140] sm:$0xff]
        %v1093 = vld [vmem:[%s3 + $0x148] sm:$0xff]
        %v1094 = vld [vmem:[%s3 + $0x150] sm:$0xff]
        %v1095 = vld [vmem:[%s3 + $0x158] sm:$0xff]
        %v1096 = vld [vmem:[%s3 + $0x160] sm:$0xff]
        %v1097 = vld [vmem:[%s3 + $0x168] sm:$0xff]
        %v1098 = vld [vmem:[%s3 + $0x170] sm:$0xff]
        %v1099 = vld [vmem:[%s3 + $0x178] sm:$0xff]
        %v1100 = vld [vmem:[%s3 + $0x180] sm:$0xff]
        %v1101 = vld [vmem:[%s3 + $0x188] sm:$0xff]
        %v1102 = vld [vmem:[%s3 + $0x190] sm:$0xff]
        %v1103 = vld [vmem:[%s3 + $0x198] sm:$0xff]
        %v1104 = vld [vmem:[%s3 + $0x1a0] sm:$0xff]
        %v1105 = vld [vmem:[%s3 + $0x1a8] sm:$0xff]
        %v1106 = vld [vmem:[%s3 + $0x1b0] sm:$0xff]
        %v1107 = vld [vmem:[%s3 + $0x1b8] sm:$0xff]
        %v1108 = vld [vmem:[%s3 + $0x1c0] sm:$0xff]
        %v1109 = vld [vmem:[%s3 + $0x1c8] sm:$0xff]
        %v1110 = vld [vmem:[%s3 + $0x1d0] sm:$0xff]
        %v1111 = vld [vmem:[%s3 + $0x1d8] sm:$0xff]
        %v1112 = vld [vmem:[%s3 + $0x1e0] sm:$0xff]
        %v1113 = vld [vmem:[%s3 + $0x1e8] sm:$0xff]
        %v1114 = vld [vmem:[%s3 + $0x1f0] sm:$0xff]
        %v1115 = vld [vmem:[%s3 + $0x1f8] sm:$0xff]
        %v1116 = vld [vmem:[%s3 + $0x200] sm:$0xff]
        %v1117 = vld [vmem:[%s3 + $0x208] sm:$0xff]
        %v1118 = vld [vmem:[%s3 + $0x210] sm:$0xff]
        %v1119 = vld [vmem:[%s3 + $0x218] sm:$0xff]
        %v1120 = vld [vmem:[%s3 + $0x220] sm:$0xff]
        %v1121 = vld [vmem:[%s3 + $0x228] sm:$0xff]
        %v1122 = vld [vmem:[%s3 + $0x230] sm:$0xff]
        %v1123 = vld [vmem:[%s3 + $0x238] sm:$0xff]
        %v1124 = vld [vmem:[%s3 + $0x240] sm:$0xff]
        %v1125 = vld [vmem:[%s3 + $0x248] sm:$0xff]
        %v1126 = vld [vmem:[%s3 + $0x250] sm:$0xff]
        %v1127 = vld [vmem:[%s3 + $0x258] sm:$0xff]
        %v1128 = vld [vmem:[%s3 + $0x260] sm:$0xff]
        %v1129 = vld [vmem:[%s3 + $0x268] sm:$0xff]
        %v1130 = vld [vmem:[%s3 + $0x270] sm:$0xff]
        %v1131 = vld [vmem:[%s3 + $0x278] sm:$0xff]
        %v1132 = vld [vmem:[%s3 + $0x280] sm:$0xff]
        %v1133 = vld [vmem:[%s3 + $0x288] sm:$0xff]
        %v1134 = vld [vmem:[%s3 + $0x290] sm:$0xff]
        %v1135 = vld [vmem:[%s3 + $0x298] sm:$0xff]
        %v1136 = vld [vmem:[%s3 + $0x2a0] sm:$0xff]
        %v1137 = vld [vmem:[%s3 + $0x2a8] sm:$0xff]
        %v1138 = vld [vmem:[%s3 + $0x2b0] sm:$0xff]
        %v1139 = vld [vmem:[%s3 + $0x2b8] sm:$0xff]
        %v1140 = vld [vmem:[%s3 + $0x2c0] sm:$0xff]
        %v1141 = vld [vmem:[%s3 + $0x2c8] sm:$0xff]
        %v1142 = vld [vmem:[%s3 + $0x2d0] sm:$0xff]
        %v1143 = vld [vmem:[%s3 + $0x2d8] sm:$0xff]
        %v1144 = vld [vmem:[%s3 + $0x2e0] sm:$0xff]
        %v1145 = vld [vmem:[%s3 + $0x2e8] sm:$0xff]
        %v1146 = vld [vmem:[%s3 + $0x2f0] sm:$0xff]
        %v1147 = vld [vmem:[%s3 + $0x2f8] sm:$0xff]
        %v1148 = vld [vmem:[%s3 + $0x300] sm:$0xff]
        %v1149 = vld [vmem:[%s3 + $0x308] sm:$0xff]
        %v1150 = vld [vmem:[%s3 + $0x310] sm:$0xff]
        %v1151 = vld [vmem:[%s3 + $0x318] sm:$0xff]
        %v1152 = vld [vmem:[%s3 + $0x320] sm:$0xff]
        %v1153 = vld [vmem:[%s3 + $0x328] sm:$0xff]
        %v1154 = vld [vmem:[%s3 + $0x330] sm:$0xff]
        %v1155 = vld [vmem:[%s3 + $0x338] sm:$0xff]
        %v1156 = vld [vmem:[%s3 + $0x340] sm:$0xff]
        %v1157 = vld [vmem:[%s3 + $0x348] sm:$0xff]
        %v1158 = vld [vmem:[%s3 + $0x350] sm:$0xff]
        %v1159 = vld [vmem:[%s3 + $0x358] sm:$0xff]
        %v1160 = vld [vmem:[%s3 + $0x360] sm:$0xff]
        %v1161 = vld [vmem:[%s3 + $0x368] sm:$0xff]
        %v1162 = vld [vmem:[%s3 + $0x370] sm:$0xff]
        %v1163 = vld [vmem:[%s3 + $0x378] sm:$0xff]
        %v1164 = vld [vmem:[%s3 + $0x380] sm:$0xff]
        %v1165 = vld [vmem:[%s3 + $0x388] sm:$0xff]
        %v1166 = vld [vmem:[%s3 + $0x390] sm:$0xff]
        %v1167 = vld [vmem:[%s3 + $0x398] sm:$0xff]
        %v1168 = vld [vmem:[%s3 + $0x3a0] sm:$0xff]
        %v1169 = vld [vmem:[%s3 + $0x3a8] sm:$0xff]
        %v1170 = vld [vmem:[%s3 + $0x3b0] sm:$0xff]
        %v1171 = vld [vmem:[%s3 + $0x3b8] sm:$0xff]
        %v1172 = vld [vmem:[%s3 + $0x3c0] sm:$0xff]
        %v1173 = vld [vmem:[%s3 + $0x3c8] sm:$0xff]
        %v1174 = vld [vmem:[%s3 + $0x3d0] sm:$0xff]
        %v1175 = vld [vmem:[%s3 + $0x3d8] sm:$0xff]
        %v1176 = vld [vmem:[%s3 + $0x3e0] sm:$0xff]
        %v1177 = vld [vmem:[%s3 + $0x3e8] sm:$0xff]
        %v1178 = vld [vmem:[%s3 + $0x3f0] sm:$0xff]
        %v1179 = vld [vmem:[%s3 + $0x3f8] sm:$0xff]
        %v1180 = vld [vmem:[%s3 + $0x400] sm:$0xff]
        %v1181 = vld [vmem:[%s3 + $0x408] sm:$0xff]
        %v1182 = vld [vmem:[%s3 + $0x410] sm:$0xff]
        %v1183 = vld [vmem:[%s3 + $0x418] sm:$0xff]
        %v1184 = vld [vmem:[%s3 + $0x420] sm:$0xff]
        %v1185 = vld [vmem:[%s3 + $0x428] sm:$0xff]
        %v1186 = vld [vmem:[%s3 + $0x430] sm:$0xff]
        %v1187 = vld [vmem:[%s3 + $0x438] sm:$0xff]
        %v1188 = vld [vmem:[%s3 + $0x440] sm:$0xff]
        %v1189 = vld [vmem:[%s3 + $0x448] sm:$0xff]
        %v1190 = vld [vmem:[%s3 + $0x450] sm:$0xff]
        %v1191 = vld [vmem:[%s3 + $0x458] sm:$0xff]
        %v1192 = vld [vmem:[%s3 + $0x460] sm:$0xff]
        %v1193 = vld [vmem:[%s3 + $0x468] sm:$0xff]
        %v1194 = vld [vmem:[%s3 + $0x470] sm:$0xff]
        %v1195 = vld [vmem:[%s3 + $0x478] sm:$0xff]
        %v1196 = vld [vmem:[%s3 + $0x480] sm:$0xff]
        %v1197 = vld [vmem:[%s3 + $0x488] sm:$0xff]
        %v1198 = vld [vmem:[%s3 + $0x490] sm:$0xff]
        %v1199 = vld [vmem:[%s3 + $0x498] sm:$0xff]
        %v1200 = vld [vmem:[%s3 + $0x4a0] sm:$0xff]
        %v1201 = vld [vmem:[%s3 + $0x4a8] sm:$0xff]
        %v1202 = vld [vmem:[%s3 + $0x4b0] sm:$0xff]
        %v1203 = vld [vmem:[%s3 + $0x4b8] sm:$0xff]
        %v1204 = vld [vmem:[%s3 + $0x4c0] sm:$0xff]
        %v1205 = vld [vmem:[%s3 + $0x4c8] sm:$0xff]
        %v1206 = vld [vmem:[%s3 + $0x4d0] sm:$0xff]
        %v1207 = vld [vmem:[%s3 + $0x4d8] sm:$0xff]
        %v1208 = vld [vmem:[%s3 + $0x4e0] sm:$0xff]
        %v1209 = vld [vmem:[%s3 + $0x4e8] sm:$0xff]
        %v1210 = vld [vmem:[%s3 + $0x4f0] sm:$0xff]
        %v1211 = vld [vmem:[%s3 + $0x4f8] sm:$0xff]
        %v1212 = vld [vmem:[%s3 + $0x500] sm:$0xff]
        %v1213 = vld [vmem:[%s3 + $0x508] sm:$0xff]
        %v1214 = vld [vmem:[%s3 + $0x510] sm:$0xff]
        %v1215 = vld [vmem:[%s3 + $0x518] sm:$0xff]
        %v1216 = vld [vmem:[%s3 + $0x520] sm:$0xff]
        %v1217 = vld [vmem:[%s3 + $0x528] sm:$0xff]
        %v1218 = vld [vmem:[%s3 + $0x530] sm:$0xff]
        %v1219 = vld [vmem:[%s3 + $0x538] sm:$0xff]
        %v1220 = vld [vmem:[%s3 + $0x540] sm:$0xff]
        %v1221 = vld [vmem:[%s3 + $0x548] sm:$0xff]
        %v1222 = vld [vmem:[%s3 + $0x550] sm:$0xff]
        %v1223 = vld [vmem:[%s3 + $0x558] sm:$0xff]
        %v1224 = vld [vmem:[%s3 + $0x560] sm:$0xff]
        %v1225 = vld [vmem:[%s3 + $0x568] sm:$0xff]
        %v1226 = vld [vmem:[%s3 + $0x570] sm:$0xff]
        %v1227 = vld [vmem:[%s3 + $0x578] sm:$0xff]
        %v1228 = vld [vmem:[%s3 + $0x580] sm:$0xff]
        %v1229 = vld [vmem:[%s3 + $0x588] sm:$0xff]
        %v1230 = vld [vmem:[%s3 + $0x590] sm:$0xff]
        %v1231 = vld [vmem:[%s3 + $0x598] sm:$0xff]
        %v1232 = vld [vmem:[%s3 + $0x5a0] sm:$0xff]
        %v1233 = vld [vmem:[%s3 + $0x5a8] sm:$0xff]
        %v1234 = vld [vmem:[%s3 + $0x5b0] sm:$0xff]
        %v1235 = vld [vmem:[%s3 + $0x5b8] sm:$0xff]
        %v1236 = vld [vmem:[%s3 + $0x5c0] sm:$0xff]
        %v1237 = vld [vmem:[%s3 + $0x5c8] sm:$0xff]
        %v1238 = vld [vmem:[%s3 + $0x5d0] sm:$0xff]
        %v1239 = vld [vmem:[%s3 + $0x5d8] sm:$0xff]
        %v1240 = vld [vmem:[%s3 + $0x5e0] sm:$0xff]
        %v1241 = vld [vmem:[%s3 + $0x5e8] sm:$0xff]
        %v1242 = vld [vmem:[%s3 + $0x5f0] sm:$0xff]
        %v1243 = vld [vmem:[%s3 + $0x5f8] sm:$0xff]
        %v1244 = vld [vmem:[%s3 + $0x600] sm:$0xff]
        %v1245 = vld [vmem:[%s3 + $0x608] sm:$0xff]
        %v1246 = vld [vmem:[%s3 + $0x610] sm:$0xff]
        %v1247 = vld [vmem:[%s3 + $0x618] sm:$0xff]
        %v1248 = vld [vmem:[%s3 + $0x620] sm:$0xff]
        %v1249 = vld [vmem:[%s3 + $0x628] sm:$0xff]
        %v1250 = vld [vmem:[%s3 + $0x630] sm:$0xff]
        %v1251 = vld [vmem:[%s3 + $0x638] sm:$0xff]
        %v1252 = vld [vmem:[%s3 + $0x640] sm:$0xff]
        %v1253 = vld [vmem:[%s3 + $0x648] sm:$0xff]
        %v1254 = vld [vmem:[%s3 + $0x650] sm:$0xff]
        %v1255 = vld [vmem:[%s3 + $0x658] sm:$0xff]
        %v1256 = vld [vmem:[%s3 + $0x660] sm:$0xff]
        %v1257 = vld [vmem:[%s3 + $0x668] sm:$0xff]
        %v1258 = vld [vmem:[%s3 + $0x670] sm:$0xff]
        %v1259 = vld [vmem:[%s3 + $0x678] sm:$0xff]
        %v1260 = vld [vmem:[%s3 + $0x680] sm:$0xff]
        %v1261 = vld [vmem:[%s3 + $0x688] sm:$0xff]
        %v1262 = vld [vmem:[%s3 + $0x690] sm:$0xff]
        %v1263 = vld [vmem:[%s3 + $0x698] sm:$0xff]
        %v1264 = vld [vmem:[%s3 + $0x6a0] sm:$0xff]
        %v1265 = vld [vmem:[%s3 + $0x6a8] sm:$0xff]
        %v1266 = vld [vmem:[%s3 + $0x6b0] sm:$0xff]
        %v1267 = vld [vmem:[%s3 + $0x6b8] sm:$0xff]
        %v1268 = vld [vmem:[%s3 + $0x6c0] sm:$0xff]
        %v1269 = vld [vmem:[%s3 + $0x6c8] sm:$0xff]
        %v1270 = vld [vmem:[%s3 + $0x6d0] sm:$0xff]
        %v1271 = vld [vmem:[%s3 + $0x6d8] sm:$0xff]
        %v1272 = vld [vmem:[%s3 + $0x6e0] sm:$0xff]
        %v1273 = vld [vmem:[%s3 + $0x6e8] sm:$0xff]
        %v1274 = vld [vmem:[%s3 + $0x6f0] sm:$0xff]
        %v1275 = vld [vmem:[%s3 + $0x6f8] sm:$0xff]
        %v1276 = vld [vmem:[%s3 + $0x700] sm:$0xff]
        %v1277 = vld [vmem:[%s3 + $0x708] sm:$0xff]
        %v1278 = vld [vmem:[%s3 + $0x710] sm:$0xff]
        %v1279 = vld [vmem:[%s3 + $0x718] sm:$0xff]
        %v1280 = vld [vmem:[%s3 + $0x720] sm:$0xff]
        %v1281 = vld [vmem:[%s3 + $0x728] sm:$0xff]
        %v1282 = vld [vmem:[%s3 + $0x730] sm:$0xff]
        %v1283 = vld [vmem:[%s3 + $0x738] sm:$0xff]
        %v1284 = vld [vmem:[%s3 + $0x740] sm:$0xff]
        %v1285 = vld [vmem:[%s3 + $0x748] sm:$0xff]
        %v1286 = vld [vmem:[%s3 + $0x750] sm:$0xff]
        %v1287 = vld [vmem:[%s3 + $0x758] sm:$0xff]
        %v1288 = vld [vmem:[%s3 + $0x760] sm:$0xff]
        %v1289 = vld [vmem:[%s3 + $0x768] sm:$0xff]
        %v1290 = vld [vmem:[%s3 + $0x770] sm:$0xff]
        %v1291 = vld [vmem:[%s3 + $0x778] sm:$0xff]
        %v1292 = vld [vmem:[%s3 + $0x780] sm:$0xff]
        %v1293 = vld [vmem:[%s3 + $0x788] sm:$0xff]
        %v1294 = vld [vmem:[%s3 + $0x790] sm:$0xff]
        %v1295 = vld [vmem:[%s3 + $0x798] sm:$0xff]
        %v1296 = vld [vmem:[%s3 + $0x7a0] sm:$0xff]
        %v1297 = vld [vmem:[%s3 + $0x7a8] sm:$0xff]
        %v1298 = vld [vmem:[%s3 + $0x7b0] sm:$0xff]
        %v1299 = vld [vmem:[%s3 + $0x7b8] sm:$0xff]
        %v1300 = vld [vmem:[%s3 + $0x7c0] sm:$0xff]
        %v1301 = vld [vmem:[%s3 + $0x7c8] sm:$0xff]
        %v1302 = vld [vmem:[%s3 + $0x7d0] sm:$0xff]
        %v1303 = vld [vmem:[%s3 + $0x7d8] sm:$0xff]
        %v1304 = vld [vmem:[%s3 + $0x7e0] sm:$0xff]
        %v1305 = vld [vmem:[%s3 + $0x7e8] sm:$0xff]
        %v1306 = vld [vmem:[%s3 + $0x7f0] sm:$0xff]
        %v1307 = vld [vmem:[%s3 + $0x7f8] sm:$0xff]
        %1308 = vmatpush.msra.mxu0 %v1067
        %1309 = vmatpush.msra.mxu0 %v1066
        %1310 = vmatpush.msra.mxu0 %v1065
        %1311 = vmatpush.msra.mxu0 %v1064
        %1312 = vmatpush.msra.mxu0 %v1063
        %1313 = vmatpush.msra.mxu0 %v1062
        %1314 = vmatpush.msra.mxu0 %v1061
        %1315 = vmatpush.msra.mxu0 %v1060
        %1316 = vmatpush.msra.mxu0 %v1059
        %1317 = vmatpush.msra.mxu0 %v1058
        %1318 = vmatpush.msra.mxu0 %v1057
        %1319 = vmatpush.msra.mxu0 %v1056
        %1320 = vmatpush.msra.mxu0 %v1055
        %1321 = vmatpush.msra.mxu0 %v1054
        %1322 = vmatpush.msra.mxu0 %v1053
        %1323 = vmatpush.msra.mxu0 %v1052
        %1324 = vmatmul.f32.gmra.mxu0 %v988
        %v1325 = vpop.f32.mrf.mxu0
        %v1326 = vadd.f32 0.0, %v1325
        %1327 = vmatmul.f32.gmra.mxu0 %v1004
        %v1328 = vpop.f32.mrf.mxu0
        %v1329 = vadd.f32 0.0, %v1328
        %1330 = vmatmul.f32.gmra.mxu0 %v1020
        %v1331 = vpop.f32.mrf.mxu0
        %v1332 = vadd.f32 0.0, %v1331
        %1333 = vmatmul.f32.gmra.mxu0 %v1036
        %v1334 = vpop.f32.mrf.mxu0
        %v1335 = vadd.f32 0.0, %v1334
        %1336 = vdwg.mxu0
        %1337 = vmatpush.msra.mxu0 %v1083
        %1338 = vmatpush.msra.mxu0 %v1082
        %1339 = vmatpush.msra.mxu0 %v1081
        %1340 = vmatpush.msra.mxu0 %v1080
        %1341 = vmatpush.msra.mxu0 %v1079
        %1342 = vmatpush.msra.mxu0 %v1078
        %1343 = vmatpush.msra.mxu0 %v1077
        %1344 = vmatpush.msra.mxu0 %v1076
        %1345 = vmatpush.msra.mxu0 %v1075
        %1346 = vmatpush.msra.mxu0 %v1074
        %1347 = vmatpush.msra.mxu0 %v1073
        %1348 = vmatpush.msra.mxu0 %v1072
        %1349 = vmatpush.msra.mxu0 %v1071
        %1350 = vmatpush.msra.mxu0 %v1070
        %1351 = vmatpush.msra.mxu0 %v1069
        %1352 = vmatpush.msra.mxu0 %v1068
        %1353 = vmatmul.f32.gmra.mxu0 %v989
        %v1354 = vpop.f32.mrf.mxu0
        %v1355 = vadd.f32 %v1326, %v1354
        %1356 = vmatmul.f32.gmra.mxu0 %v1005
        %v1357 = vpop.f32.mrf.mxu0
        %v1358 = vadd.f32 %v1329, %v1357
        %1359 = vmatmul.f32.gmra.mxu0 %v1021
        %v1360 = vpop.f32.mrf.mxu0
        %v1361 = vadd.f32 %v1332, %v1360
        %1362 = vmatmul.f32.gmra.mxu0 %v1037
        %v1363 = vpop.f32.mrf.mxu0
        %v1364 = vadd.f32 %v1335, %v1363
        %1365 = vdwg.mxu0
        %1366 = vmatpush.msra.mxu0 %v1099
        %1367 = vmatpush.msra.mxu0 %v1098
        %1368 = vmatpush.msra.mxu0 %v1097
        %1369 = vmatpush.msra.mxu0 %v1096
        %1370 = vmatpush.msra.mxu0 %v1095
        %1371 = vmatpush.msra.mxu0 %v1094
        %1372 = vmatpush.msra.mxu0 %v1093
        %1373 = vmatpush.msra.mxu0 %v1092
        %1374 = vmatpush.msra.mxu0 %v1091
        %1375 = vmatpush.msra.mxu0 %v1090
        %1376 = vmatpush.msra.mxu0 %v1089
        %1377 = vmatpush.msra.mxu0 %v1088
        %1378 = vmatpush.msra.mxu0 %v1087
        %1379 = vmatpush.msra.mxu0 %v1086
        %1380 = vmatpush.msra.mxu0 %v1085
        %1381 = vmatpush.msra.mxu0 %v1084
        %1382 = vmatmul.f32.gmra.mxu0 %v990
        %v1383 = vpop.f32.mrf.mxu0
        %v1384 = vadd.f32 %v1355, %v1383
        %1385 = vmatmul.f32.gmra.mxu0 %v1006
        %v1386 = vpop.f32.mrf.mxu0
        %v1387 = vadd.f32 %v1358, %v1386
        %1388 = vmatmul.f32.gmra.mxu0 %v1022
        %v1389 = vpop.f32.mrf.mxu0
        %v1390 = vadd.f32 %v1361, %v1389
        %1391 = vmatmul.f32.gmra.mxu0 %v1038
        %v1392 = vpop.f32.mrf.mxu0
        %v1393 = vadd.f32 %v1364, %v1392
        %1394 = vdwg.mxu0
        %1395 = vmatpush.msra.mxu0 %v1115
        %1396 = vmatpush.msra.mxu0 %v1114
        %1397 = vmatpush.msra.mxu0 %v1113
        %1398 = vmatpush.msra.mxu0 %v1112
        %1399 = vmatpush.msra.mxu0 %v1111
        %1400 = vmatpush.msra.mxu0 %v1110
        %1401 = vmatpush.msra.mxu0 %v1109
        %1402 = vmatpush.msra.mxu0 %v1108
        %1403 = vmatpush.msra.mxu0 %v1107
        %1404 = vmatpush.msra.mxu0 %v1106
        %1405 = vmatpush.msra.mxu0 %v1105
        %1406 = vmatpush.msra.mxu0 %v1104
        %1407 = vmatpush.msra.mxu0 %v1103
        %1408 = vmatpush.msra.mxu0 %v1102
        %1409 = vmatpush.msra.mxu0 %v1101
        %1410 = vmatpush.msra.mxu0 %v1100
        %1411 = vmatmul.f32.gmra.mxu0 %v991
        %v1412 = vpop.f32.mrf.mxu0
        %v1413 = vadd.f32 %v1384, %v1412
        %1414 = vmatmul.f32.gmra.mxu0 %v1007
        %v1415 = vpop.f32.mrf.mxu0
        %v1416 = vadd.f32 %v1387, %v1415
        %1417 = vmatmul.f32.gmra.mxu0 %v1023
        %v1418 = vpop.f32.mrf.mxu0
        %v1419 = vadd.f32 %v1390, %v1418
        %1420 = vmatmul.f32.gmra.mxu0 %v1039
        %v1421 = vpop.f32.mrf.mxu0
        %v1422 = vadd.f32 %v1393, %v1421
        %1423 = vdwg.mxu0
        %1424 = vmatpush.msra.mxu0 %v1131
        %1425 = vmatpush.msra.mxu0 %v1130
        %1426 = vmatpush.msra.mxu0 %v1129
        %1427 = vmatpush.msra.mxu0 %v1128
        %1428 = vmatpush.msra.mxu0 %v1127
        %1429 = vmatpush.msra.mxu0 %v1126
        %1430 = vmatpush.msra.mxu0 %v1125
        %1431 = vmatpush.msra.mxu0 %v1124
        %1432 = vmatpush.msra.mxu0 %v1123
        %1433 = vmatpush.msra.mxu0 %v1122
        %1434 = vmatpush.msra.mxu0 %v1121
        %1435 = vmatpush.msra.mxu0 %v1120
        %1436 = vmatpush.msra.mxu0 %v1119
        %1437 = vmatpush.msra.mxu0 %v1118
        %1438 = vmatpush.msra.mxu0 %v1117
        %1439 = vmatpush.msra.mxu0 %v1116
        %1440 = vmatmul.f32.gmra.mxu0 %v992
        %v1441 = vpop.f32.mrf.mxu0
        %v1442 = vadd.f32 %v1413, %v1441
        %1443 = vmatmul.f32.gmra.mxu0 %v1008
        %v1444 = vpop.f32.mrf.mxu0
        %v1445 = vadd.f32 %v1416, %v1444
        %1446 = vmatmul.f32.gmra.mxu0 %v1024
        %v1447 = vpop.f32.mrf.mxu0
        %v1448 = vadd.f32 %v1419, %v1447
        %1449 = vmatmul.f32.gmra.mxu0 %v1040
        %v1450 = vpop.f32.mrf.mxu0
        %v1451 = vadd.f32 %v1422, %v1450
        %1452 = vdwg.mxu0
        %1453 = vmatpush.msra.mxu0 %v1147
        %1454 = vmatpush.msra.mxu0 %v1146
        %1455 = vmatpush.msra.mxu0 %v1145
        %1456 = vmatpush.msra.mxu0 %v1144
        %1457 = vmatpush.msra.mxu0 %v1143
        %1458 = vmatpush.msra.mxu0 %v1142
        %1459 = vmatpush.msra.mxu0 %v1141
        %1460 = vmatpush.msra.mxu0 %v1140
        %1461 = vmatpush.msra.mxu0 %v1139
        %1462 = vmatpush.msra.mxu0 %v1138
        %1463 = vmatpush.msra.mxu0 %v1137
        %1464 = vmatpush.msra.mxu0 %v1136
        %1465 = vmatpush.msra.mxu0 %v1135
        %1466 = vmatpush.msra.mxu0 %v1134
        %1467 = vmatpush.msra.mxu0 %v1133
        %1468 = vmatpush.msra.mxu0 %v1132
        %1469 = vmatmul.f32.gmra.mxu0 %v993
        %v1470 = vpop.f32.mrf.mxu0
        %v1471 = vadd.f32 %v1442, %v1470
        %1472 = vmatmul.f32.gmra.mxu0 %v1009
        %v1473 = vpop.f32.mrf.mxu0
        %v1474 = vadd.f32 %v1445, %v1473
        %1475 = vmatmul.f32.gmra.mxu0 %v1025
        %v1476 = vpop.f32.mrf.mxu0
        %v1477 = vadd.f32 %v1448, %v1476
        %1478 = vmatmul.f32.gmra.mxu0 %v1041
        %v1479 = vpop.f32.mrf.mxu0
        %v1480 = vadd.f32 %v1451, %v1479
        %1481 = vdwg.mxu0
        %1482 = vmatpush.msra.mxu0 %v1163
        %1483 = vmatpush.msra.mxu0 %v1162
        %1484 = vmatpush.msra.mxu0 %v1161
        %1485 = vmatpush.msra.mxu0 %v1160
        %1486 = vmatpush.msra.mxu0 %v1159
        %1487 = vmatpush.msra.mxu0 %v1158
        %1488 = vmatpush.msra.mxu0 %v1157
        %1489 = vmatpush.msra.mxu0 %v1156
        %1490 = vmatpush.msra.mxu0 %v1155
        %1491 = vmatpush.msra.mxu0 %v1154
        %1492 = vmatpush.msra.mxu0 %v1153
        %1493 = vmatpush.msra.mxu0 %v1152
        %1494 = vmatpush.msra.mxu0 %v1151
        %1495 = vmatpush.msra.mxu0 %v1150
        %1496 = vmatpush.msra.mxu0 %v1149
        %1497 = vmatpush.msra.mxu0 %v1148
        %1498 = vmatmul.f32.gmra.mxu0 %v994
        %v1499 = vpop.f32.mrf.mxu0
        %v1500 = vadd.f32 %v1471, %v1499
        %1501 = vmatmul.f32.gmra.mxu0 %v1010
        %v1502 = vpop.f32.mrf.mxu0
        %v1503 = vadd.f32 %v1474, %v1502
        %1504 = vmatmul.f32.gmra.mxu0 %v1026
        %v1505 = vpop.f32.mrf.mxu0
        %v1506 = vadd.f32 %v1477, %v1505
        %1507 = vmatmul.f32.gmra.mxu0 %v1042
        %v1508 = vpop.f32.mrf.mxu0
        %v1509 = vadd.f32 %v1480, %v1508
        %1510 = vdwg.mxu0
        %1511 = vmatpush.msra.mxu0 %v1179
        %1512 = vmatpush.msra.mxu0 %v1178
        %1513 = vmatpush.msra.mxu0 %v1177
        %1514 = vmatpush.msra.mxu0 %v1176
        %1515 = vmatpush.msra.mxu0 %v1175
        %1516 = vmatpush.msra.mxu0 %v1174
        %1517 = vmatpush.msra.mxu0 %v1173
        %1518 = vmatpush.msra.mxu0 %v1172
        %1519 = vmatpush.msra.mxu0 %v1171
        %1520 = vmatpush.msra.mxu0 %v1170
        %1521 = vmatpush.msra.mxu0 %v1169
        %1522 = vmatpush.msra.mxu0 %v1168
        %1523 = vmatpush.msra.mxu0 %v1167
        %1524 = vmatpush.msra.mxu0 %v1166
        %1525 = vmatpush.msra.mxu0 %v1165
        %1526 = vmatpush.msra.mxu0 %v1164
        %1527 = vmatmul.f32.gmra.mxu0 %v995
        %v1528 = vpop.f32.mrf.mxu0
        %v1529 = vadd.f32 %v1500, %v1528
        %1530 = vmatmul.f32.gmra.mxu0 %v1011
        %v1531 = vpop.f32.mrf.mxu0
        %v1532 = vadd.f32 %v1503, %v1531
        %1533 = vmatmul.f32.gmra.mxu0 %v1027
        %v1534 = vpop.f32.mrf.mxu0
        %v1535 = vadd.f32 %v1506, %v1534
        %1536 = vmatmul.f32.gmra.mxu0 %v1043
        %v1537 = vpop.f32.mrf.mxu0
        %v1538 = vadd.f32 %v1509, %v1537
        %1539 = vdwg.mxu0
        %1540 = vmatpush.msra.mxu0 %v1195
        %1541 = vmatpush.msra.mxu0 %v1194
        %1542 = vmatpush.msra.mxu0 %v1193
        %1543 = vmatpush.msra.mxu0 %v1192
        %1544 = vmatpush.msra.mxu0 %v1191
        %1545 = vmatpush.msra.mxu0 %v1190
        %1546 = vmatpush.msra.mxu0 %v1189
        %1547 = vmatpush.msra.mxu0 %v1188
        %1548 = vmatpush.msra.mxu0 %v1187
        %1549 = vmatpush.msra.mxu0 %v1186
        %1550 = vmatpush.msra.mxu0 %v1185
        %1551 = vmatpush.msra.mxu0 %v1184
        %1552 = vmatpush.msra.mxu0 %v1183
        %1553 = vmatpush.msra.mxu0 %v1182
        %1554 = vmatpush.msra.mxu0 %v1181
        %1555 = vmatpush.msra.mxu0 %v1180
        %1556 = vmatmul.f32.gmra.mxu0 %v996
        %v1557 = vpop.f32.mrf.mxu0
        %v1558 = vadd.f32 %v1529, %v1557
        %1559 = vmatmul.f32.gmra.mxu0 %v1012
        %v1560 = vpop.f32.mrf.mxu0
        %v1561 = vadd.f32 %v1532, %v1560
        %1562 = vmatmul.f32.gmra.mxu0 %v1028
        %v1563 = vpop.f32.mrf.mxu0
        %v1564 = vadd.f32 %v1535, %v1563
        %1565 = vmatmul.f32.gmra.mxu0 %v1044
        %v1566 = vpop.f32.mrf.mxu0
        %v1567 = vadd.f32 %v1538, %v1566
        %1568 = vdwg.mxu0
        %1569 = vmatpush.msra.mxu0 %v1211
        %1570 = vmatpush.msra.mxu0 %v1210
        %1571 = vmatpush.msra.mxu0 %v1209
        %1572 = vmatpush.msra.mxu0 %v1208
        %1573 = vmatpush.msra.mxu0 %v1207
        %1574 = vmatpush.msra.mxu0 %v1206
        %1575 = vmatpush.msra.mxu0 %v1205
        %1576 = vmatpush.msra.mxu0 %v1204
        %1577 = vmatpush.msra.mxu0 %v1203
        %1578 = vmatpush.msra.mxu0 %v1202
        %1579 = vmatpush.msra.mxu0 %v1201
        %1580 = vmatpush.msra.mxu0 %v1200
        %1581 = vmatpush.msra.mxu0 %v1199
        %1582 = vmatpush.msra.mxu0 %v1198
        %1583 = vmatpush.msra.mxu0 %v1197
        %1584 = vmatpush.msra.mxu0 %v1196
        %1585 = vmatmul.f32.gmra.mxu0 %v997
        %v1586 = vpop.f32.mrf.mxu0
        %v1587 = vadd.f32 %v1558, %v1586
        %1588 = vmatmul.f32.gmra.mxu0 %v1013
        %v1589 = vpop.f32.mrf.mxu0
        %v1590 = vadd.f32 %v1561, %v1589
        %1591 = vmatmul.f32.gmra.mxu0 %v1029
        %v1592 = vpop.f32.mrf.mxu0
        %v1593 = vadd.f32 %v1564, %v1592
        %1594 = vmatmul.f32.gmra.mxu0 %v1045
        %v1595 = vpop.f32.mrf.mxu0
        %v1596 = vadd.f32 %v1567, %v1595
        %1597 = vdwg.mxu0
        %1598 = vmatpush.msra.mxu0 %v1227
        %1599 = vmatpush.msra.mxu0 %v1226
        %1600 = vmatpush.msra.mxu0 %v1225
        %1601 = vmatpush.msra.mxu0 %v1224
        %1602 = vmatpush.msra.mxu0 %v1223
        %1603 = vmatpush.msra.mxu0 %v1222
        %1604 = vmatpush.msra.mxu0 %v1221
        %1605 = vmatpush.msra.mxu0 %v1220
        %1606 = vmatpush.msra.mxu0 %v1219
        %1607 = vmatpush.msra.mxu0 %v1218
        %1608 = vmatpush.msra.mxu0 %v1217
        %1609 = vmatpush.msra.mxu0 %v1216
        %1610 = vmatpush.msra.mxu0 %v1215
        %1611 = vmatpush.msra.mxu0 %v1214
        %1612 = vmatpush.msra.mxu0 %v1213
        %1613 = vmatpush.msra.mxu0 %v1212
        %1614 = vmatmul.f32.gmra.mxu0 %v998
        %v1615 = vpop.f32.mrf.mxu0
        %v1616 = vadd.f32 %v1587, %v1615
        %1617 = vmatmul.f32.gmra.mxu0 %v1014
        %v1618 = vpop.f32.mrf.mxu0
        %v1619 = vadd.f32 %v1590, %v1618
        %1620 = vmatmul.f32.gmra.mxu0 %v1030
        %v1621 = vpop.f32.mrf.mxu0
        %v1622 = vadd.f32 %v1593, %v1621
        %1623 = vmatmul.f32.gmra.mxu0 %v1046
        %v1624 = vpop.f32.mrf.mxu0
        %v1625 = vadd.f32 %v1596, %v1624
        %1626 = vdwg.mxu0
        %1627 = vmatpush.msra.mxu0 %v1243
        %1628 = vmatpush.msra.mxu0 %v1242
        %1629 = vmatpush.msra.mxu0 %v1241
        %1630 = vmatpush.msra.mxu0 %v1240
        %1631 = vmatpush.msra.mxu0 %v1239
        %1632 = vmatpush.msra.mxu0 %v1238
        %1633 = vmatpush.msra.mxu0 %v1237
        %1634 = vmatpush.msra.mxu0 %v1236
        %1635 = vmatpush.msra.mxu0 %v1235
        %1636 = vmatpush.msra.mxu0 %v1234
        %1637 = vmatpush.msra.mxu0 %v1233
        %1638 = vmatpush.msra.mxu0 %v1232
        %1639 = vmatpush.msra.mxu0 %v1231
        %1640 = vmatpush.msra.mxu0 %v1230
        %1641 = vmatpush.msra.mxu0 %v1229
        %1642 = vmatpush.msra.mxu0 %v1228
        %1643 = vmatmul.f32.gmra.mxu0 %v999
        %v1644 = vpop.f32.mrf.mxu0
        %v1645 = vadd.f32 %v1616, %v1644
        %1646 = vmatmul.f32.gmra.mxu0 %v1015
        %v1647 = vpop.f32.mrf.mxu0
        %v1648 = vadd.f32 %v1619, %v1647
        %1649 = vmatmul.f32.gmra.mxu0 %v1031
        %v1650 = vpop.f32.mrf.mxu0
        %v1651 = vadd.f32 %v1622, %v1650
        %1652 = vmatmul.f32.gmra.mxu0 %v1047
        %v1653 = vpop.f32.mrf.mxu0
        %v1654 = vadd.f32 %v1625, %v1653
        %1655 = vdwg.mxu0
        %1656 = vmatpush.msra.mxu0 %v1259
        %1657 = vmatpush.msra.mxu0 %v1258
        %1658 = vmatpush.msra.mxu0 %v1257
        %1659 = vmatpush.msra.mxu0 %v1256
        %1660 = vmatpush.msra.mxu0 %v1255
        %1661 = vmatpush.msra.mxu0 %v1254
        %1662 = vmatpush.msra.mxu0 %v1253
        %1663 = vmatpush.msra.mxu0 %v1252
        %1664 = vmatpush.msra.mxu0 %v1251
        %1665 = vmatpush.msra.mxu0 %v1250
        %1666 = vmatpush.msra.mxu0 %v1249
        %1667 = vmatpush.msra.mxu0 %v1248
        %1668 = vmatpush.msra.mxu0 %v1247
        %1669 = vmatpush.msra.mxu0 %v1246
        %1670 = vmatpush.msra.mxu0 %v1245
        %1671 = vmatpush.msra.mxu0 %v1244
        %1672 = vmatmul.f32.gmra.mxu0 %v1000
        %v1673 = vpop.f32.mrf.mxu0
        %v1674 = vadd.f32 %v1645, %v1673
        %1675 = vmatmul.f32.gmra.mxu0 %v1016
        %v1676 = vpop.f32.mrf.mxu0
        %v1677 = vadd.f32 %v1648, %v1676
        %1678 = vmatmul.f32.gmra.mxu0 %v1032
        %v1679 = vpop.f32.mrf.mxu0
        %v1680 = vadd.f32 %v1651, %v1679
        %1681 = vmatmul.f32.gmra.mxu0 %v1048
        %v1682 = vpop.f32.mrf.mxu0
        %v1683 = vadd.f32 %v1654, %v1682
        %1684 = vdwg.mxu0
        %1685 = vmatpush.msra.mxu0 %v1275
        %1686 = vmatpush.msra.mxu0 %v1274
        %1687 = vmatpush.msra.mxu0 %v1273
        %1688 = vmatpush.msra.mxu0 %v1272
        %1689 = vmatpush.msra.mxu0 %v1271
        %1690 = vmatpush.msra.mxu0 %v1270
        %1691 = vmatpush.msra.mxu0 %v1269
        %1692 = vmatpush.msra.mxu0 %v1268
        %1693 = vmatpush.msra.mxu0 %v1267
        %1694 = vmatpush.msra.mxu0 %v1266
        %1695 = vmatpush.msra.mxu0 %v1265
        %1696 = vmatpush.msra.mxu0 %v1264
        %1697 = vmatpush.msra.mxu0 %v1263
        %1698 = vmatpush.msra.mxu0 %v1262
        %1699 = vmatpush.msra.mxu0 %v1261
        %1700 = vmatpush.msra.mxu0 %v1260
        %1701 = vmatmul.f32.gmra.mxu0 %v1001
        %v1702 = vpop.f32.mrf.mxu0
        %v1703 = vadd.f32 %v1674, %v1702
        %1704 = vmatmul.f32.gmra.mxu0 %v1017
        %v1705 = vpop.f32.mrf.mxu0
        %v1706 = vadd.f32 %v1677, %v1705
        %1707 = vmatmul.f32.gmra.mxu0 %v1033
        %v1708 = vpop.f32.mrf.mxu0
        %v1709 = vadd.f32 %v1680, %v1708
        %1710 = vmatmul.f32.gmra.mxu0 %v1049
        %v1711 = vpop.f32.mrf.mxu0
        %v1712 = vadd.f32 %v1683, %v1711
        %1713 = vdwg.mxu0
        %1714 = vmatpush.msra.mxu0 %v1291
        %1715 = vmatpush.msra.mxu0 %v1290
        %1716 = vmatpush.msra.mxu0 %v1289
        %1717 = vmatpush.msra.mxu0 %v1288
        %1718 = vmatpush.msra.mxu0 %v1287
        %1719 = vmatpush.msra.mxu0 %v1286
        %1720 = vmatpush.msra.mxu0 %v1285
        %1721 = vmatpush.msra.mxu0 %v1284
        %1722 = vmatpush.msra.mxu0 %v1283
        %1723 = vmatpush.msra.mxu0 %v1282
        %1724 = vmatpush.msra.mxu0 %v1281
        %1725 = vmatpush.msra.mxu0 %v1280
        %1726 = vmatpush.msra.mxu0 %v1279
        %1727 = vmatpush.msra.mxu0 %v1278
        %1728 = vmatpush.msra.mxu0 %v1277
        %1729 = vmatpush.msra.mxu0 %v1276
        %1730 = vmatmul.f32.gmra.mxu0 %v1002
        %v1731 = vpop.f32.mrf.mxu0
        %v1732 = vadd.f32 %v1703, %v1731
        %1733 = vmatmul.f32.gmra.mxu0 %v1018
        %v1734 = vpop.f32.mrf.mxu0
        %v1735 = vadd.f32 %v1706, %v1734
        %1736 = vmatmul.f32.gmra.mxu0 %v1034
        %v1737 = vpop.f32.mrf.mxu0
        %v1738 = vadd.f32 %v1709, %v1737
        %1739 = vmatmul.f32.gmra.mxu0 %v1050
        %v1740 = vpop.f32.mrf.mxu0
        %v1741 = vadd.f32 %v1712, %v1740
        %1742 = vdwg.mxu0
        %1743 = vmatpush.msra.mxu0 %v1307
        %1744 = vmatpush.msra.mxu0 %v1306
        %1745 = vmatpush.msra.mxu0 %v1305
        %1746 = vmatpush.msra.mxu0 %v1304
        %1747 = vmatpush.msra.mxu0 %v1303
        %1748 = vmatpush.msra.mxu0 %v1302
        %1749 = vmatpush.msra.mxu0 %v1301
        %1750 = vmatpush.msra.mxu0 %v1300
        %1751 = vmatpush.msra.mxu0 %v1299
        %1752 = vmatpush.msra.mxu0 %v1298
        %1753 = vmatpush.msra.mxu0 %v1297
        %1754 = vmatpush.msra.mxu0 %v1296
        %1755 = vmatpush.msra.mxu0 %v1295
        %1756 = vmatpush.msra.mxu0 %v1294
        %1757 = vmatpush.msra.mxu0 %v1293
        %1758 = vmatpush.msra.mxu0 %v1292
        %1759 = vmatmul.f32.gmra.mxu0 %v1003
        %v1760 = vpop.f32.mrf.mxu0
        %v1761 = vadd.f32 %v1732, %v1760
        %1762 = vmatmul.f32.gmra.mxu0 %v1019
        %v1763 = vpop.f32.mrf.mxu0
        %v1764 = vadd.f32 %v1735, %v1763
        %1765 = vmatmul.f32.gmra.mxu0 %v1035
        %v1766 = vpop.f32.mrf.mxu0
        %v1767 = vadd.f32 %v1738, %v1766
        %1768 = vmatmul.f32.gmra.mxu0 %v1051
        %v1769 = vpop.f32.mrf.mxu0
        %v1770 = vadd.f32 %v1741, %v1769
        %1771 = vdwg.mxu0
        %1772 = vxpose.xlu0.b32.start [1/16] %v1761, 128
        %1773 = vxpose.xlu0.b32.cont [2/16] %v1764, 128
        %1774 = vxpose.xlu0.b32.cont [3/16] %v1767, 128
        %1775 = vxpose.xlu0.b32.cont [4/16] %v1770, 128
        %1776 = vxpose.xlu0.b32.cont [5/16] 0.0, 128
        %1777 = vxpose.xlu0.b32.cont [6/16] 0.0, 128
        %1778 = vxpose.xlu0.b32.cont [7/16] 0.0, 128
        %1779 = vxpose.xlu0.b32.cont [8/16] 0.0, 128
        %1780 = vxpose.xlu0.b32.cont [9/16] 0.0, 128
        %1781 = vxpose.xlu0.b32.cont [10/16] 0.0, 128
        %1782 = vxpose.xlu0.b32.cont [11/16] 0.0, 128
        %1783 = vxpose.xlu0.b32.cont [12/16] 0.0, 128
        %1784 = vxpose.xlu0.b32.cont [13/16] 0.0, 128
        %1785 = vxpose.xlu0.b32.cont [14/16] 0.0, 128
        %1786 = vxpose.xlu0.b32.cont [15/16] 0.0, 128
        %1787 = vxpose.xlu0.b32.end [16/16] 0.0, 128
        %v1788 = vpop.trf.xlu0
        %v1789 = vpop.trf.xlu0
        %v1790 = vpop.trf.xlu0
        %v1791 = vpop.trf.xlu0
        %v1792 = vpop.trf.xlu0
        %v1793 = vpop.trf.xlu0
        %v1794 = vpop.trf.xlu0
        %v1795 = vpop.trf.xlu0
        %v1796 = vpop.trf.xlu0
        %v1797 = vpop.trf.xlu0
        %v1798 = vpop.trf.xlu0
        %v1799 = vpop.trf.xlu0
        %v1800 = vpop.trf.xlu0
        %v1801 = vpop.trf.xlu0
        %v1802 = vpop.trf.xlu0
        %v1803 = vpop.trf.xlu0
        %v1804 = vld [vmem:[%s4] sm:$0xff]
        %v1805 = vld [vmem:[%s4 + $0x8] sm:$0xff]
        %v1806 = vld [vmem:[%s4 + $0x10] sm:$0xff]
        %v1807 = vld [vmem:[%s4 + $0x18] sm:$0xff]
        %v1808 = vld [vmem:[%s5] sm:$0x1]
        %v1810 = vperm.slane %v1808, 0
        %vm1812 = vcmask 261120
        %v1814 = vsel %vm1812, %v1788, 0
        %1816 = vmatpush.msra.mxu0 0.0
        %1817 = vmatpush.msra.mxu0 0.0
        %1818 = vmatpush.msra.mxu0 0.0
        %1819 = vmatpush.msra.mxu0 0.0
        %1820 = vmatpush.msra.mxu0 0.0
        %1821 = vmatpush.msra.mxu0 0.0
        %1822 = vmatpush.msra.mxu0 0.0
        %1823 = vmatpush.msra.mxu0 0.0
        %1824 = vmatpush.msra.mxu0 0.0
        %1825 = vmatpush.msra.mxu0 0.0
        %1826 = vmatpush.msra.mxu0 0.0
        %1827 = vmatpush.msra.mxu0 0.0
        %1828 = vmatpush.msra.mxu0 %v1807
        %1829 = vmatpush.msra.mxu0 %v1806
        %1830 = vmatpush.msra.mxu0 %v1805
        %1831 = vmatpush.msra.mxu0 %v1804
        %1832 = vmatmul.f32.gmra.mxu0 %v1814
        %v1833 = vpop.f32.mrf.mxu0
        %v1834 = vadd.f32 %v1810, %v1833
        %1835 = vdwg.mxu0
        %1836 = vst.msk [vmem:[%s347] sm:$0xff] %vm1812, %v1834
        %s1837 = sand.u32 %s159, 1
        %s1838 = scalar_lea.sflag [#allocation4], %s1837
        %s1839 = sand.u32 %s159, 1
        %s1840 = smul.addr %s1839, 8
        %s1841 = scalar_lea.vmem [#allocation3], %s1840
        // Predicated region
        $region68: #{tpu_custom_call.1} parent=62 // pred_check
          %p1842 = pneg %p169
        $region69: #{tpu_custom_call.1} parent=62 // pred_check_branch
          %1844 = sbr.rel (%p1842) target = $region71
        $region70: #{tpu_custom_call.1} parent=62 // pred_region
          %1846 = vsyncadd %s1838, 0
          %s1847 = smul.addr %s20, 8
          %s1848 = scalar_lea.hbm %s6, %s1847
          %s1850 = sshll.u32 %s1841, 4
          %s1851 = int_to_ptr.vmem [resolvable:$true] %s1850
          %s1852 = sshll.u32 %s1848, 4
          %s1853 = int_to_ptr.hbm [resolvable:$true] %s1852
          %1855 = dma.vmem_to_hbm [thread:$0]  %s1851, 128, %s1853, %s1838
        $region71: #{tpu_custom_call.1} parent=62 // pred_fallthru
          _
      $region63: #{tpu_custom_call.1} parent=5 // pred_fallthru
        _
      %p1856 = scmp.le.s32.totalorder 2, %s15
      // Predicated region
      $region72: #{tpu_custom_call.1} parent=5 // pred_check
        %p1857 = pneg %p1856
      $region73: #{tpu_custom_call.1} parent=5 // pred_check_branch
        %1859 = sbr.rel (%p1857) target = $region75
      $region74: #{tpu_custom_call.1} parent=5 // pred_region
        %s1860 = ssub.s32 %s15, 2
        // Predicated region
        $region76: #{tpu_custom_call.1} parent=74 // pred_check
          %p1861 = pneg %p175
        $region77: #{tpu_custom_call.1} parent=74 // pred_check_branch
          %1863 = sbr.rel (%p1861) target = $region79
        $region78: #{tpu_custom_call.1} parent=74 // pred_region
          %s1864 = sand.u32 %s160, 1
          %s1865 = scalar_lea.sflag [#allocation4], %s1864
          %s1866 = sand.u32 %s160, 1
          %s1867 = smul.addr %s1866, 8
          %s1868 = scalar_lea.vmem [#allocation3], %s1867
          %1870 = dma.done %s1865, 128
        $region79: #{tpu_custom_call.1} parent=74 // pred_fallthru
          _
      $region75: #{tpu_custom_call.1} parent=5 // pred_fallthru
        _
    $region6: #{tpu_custom_call.1} parent=1 // loop_footer
      %s19 = sadd.s32 1, %s15
    $region7: #{tpu_custom_call.1} parent=1 // loop_footer_branch
      %14 = sbr.rel target = $region3
    $region8: #{tpu_custom_call.1} parent=1 // loop_exit
      _
    %1871 = vsyncpa [#allocation4], 1
    %s1872 = scalar_lea.sflag [#allocation4], 1
    %1873 = vsyncpa %s1872, 1

</llo_original>
